<compile_context>
chip_gen: v7x
topology: tpu7x:2x2x1
jax: 0.10.0
libtpu: 0.0.40
codegen_flags: <defaults>
</compile_context>

<pallas_src>
import functools

import jax
import jax.numpy as jnp
from jax import lax
from jax.experimental import pallas as pl
from jax.experimental.pallas import tpu as pltpu

K = 7            # kernel_size of nn.Conv2d(2, 1, kernel_size=7, padding=3)
PAD = K // 2


def _fused_kernel(w_ref, b_ref, x_ref, o_ref, mm_ref, *, H, W, C, c_tile, rpad):
    # w_ref : SMEM (2*K*K,) flattened conv weight (avg-channel pre-scaled by 1/C)
    # b_ref : SMEM (1,) conv bias
    # x_ref : VMEM (1, c_tile, H*W) lane-dense channel tile of x
    # o_ref : VMEM (1, 1, H*W) output block (resident across the channel axis)
    # mm_ref: VMEM (2, rpad + H*W + rpad): zero-padded running [max, sum] maps
    ci = pl.program_id(1)
    n_ci = pl.num_programs(1)
    HW = H * W

    xt = x_ref[0]                                       # (c_tile, HW), lane-dense
    if C % c_tile != 0:
        # Remainder channel tile: mask out-of-range channels (identity: -inf for
        # max, 0 for sum). Only traced in when C does not divide evenly.
        ch = ci * c_tile + lax.broadcasted_iota(jnp.int32, xt.shape, 0)
        valid = ch < C
        t_max = jnp.max(jnp.where(valid, xt, -jnp.inf), axis=0, keepdims=True)
        t_sum = jnp.sum(jnp.where(valid, xt, 0.0), axis=0, keepdims=True)
    else:
        t_max = jnp.max(xt, axis=0, keepdims=True)      # (1, HW)
        t_sum = jnp.sum(xt, axis=0, keepdims=True)      # (1, HW)

    @pl.when(ci == 0)
    def _init():
        # Zero the whole buffer so the +-rpad halo is a true zero "SAME" pad.
        mm_ref[...] = jnp.zeros_like(mm_ref)
        mm_ref[0:1, rpad:rpad + HW] = t_max
        mm_ref[1:2, rpad:rpad + HW] = t_sum

    @pl.when(ci != 0)
    def _accumulate():
        mm_ref[0:1, rpad:rpad + HW] = jnp.maximum(mm_ref[0:1, rpad:rpad + HW], t_max)
        mm_ref[1:2, rpad:rpad + HW] = mm_ref[1:2, rpad:rpad + HW] + t_sum

    @pl.when(ci == n_ci - 1)
    def _finalize():
        # Hoist all SMEM scalar reads up front (weights + bias).
        ws = [w_ref[i] for i in range(2 * K * K)]
        bias = b_ref[0]

        # Flat-domain 7x7 cross-correlation (nn.Conv2d semantics) + bias.
        # For tap (c, di, dj) the source flat index is p + (di-PAD)*W + (dj-PAD);
        # row out-of-bounds lands in the zero halo of mm_ref, column wrap-around
        # is killed by one per-dj column-validity mask applied to the dj-partial.
        col = lax.broadcasted_iota(jnp.int32, (1, HW), 1) % W
        acc = jnp.full((1, HW), bias, dtype=jnp.float32)
        for dj in range(K):
            sc = col + (dj - PAD)
            mask = ((sc >= 0) & (sc < W)).astype(jnp.float32)
            part = jnp.zeros((1, HW), jnp.float32)
            for c in range(2):                       # independent partials -> ILP
                part_c = jnp.zeros((1, HW), jnp.float32)
                for di in range(K):
                    off = rpad + (di - PAD) * W + (dj - PAD)
                    part_c = part_c + ws[(c * K + di) * K + dj] * mm_ref[c:c + 1, off:off + HW]
                part = part + part_c
            acc = acc + mask * part
        o_ref[0] = jax.nn.sigmoid(acc)               # lane-dense (1, HW) store


def spatial_attention(x, weight, bias):
    """x: (B, C, H, W) f32, weight: (1, 2, K, K), bias: (1,). Returns (B, 1, H, W)."""
    B, C, H, W = x.shape
    HW = H * W
    x = x.astype(jnp.float32)

    # ---- VMEM-budget-aware channel tile (no divisibility requirement) -------
    # Keep the double-buffered x block around <=16 MiB (safe on v5e/v6e/v7x).
    x_block_budget = 16 * 1024 * 1024
    c_tile = max(1, x_block_budget // (2 * HW * 4))
    c_tile = min(c_tile, C)
    if c_tile < C:
        c_tile = min(C, max(8, (c_tile // 8) * 8))   # keep sublane-aligned blocks
    n_ci = pl.cdiv(C, c_tile)

    # Zero halo for the flat-domain conv (>= PAD*W + PAD), rounded to lanes.
    rpad = ((PAD * W + PAD + 127) // 128) * 128
    LP = HW + 2 * rpad

    # Fold the 1/C of the channel mean into the avg-channel conv weights so the
    # kernel only accumulates a raw channel sum.
    w = weight.reshape(2, K * K).astype(jnp.float32)
    w = w.at[1].multiply(1.0 / C)
    w_flat = w.reshape(-1)                           # (2*K*K,)
    b_flat = bias.reshape(-1).astype(jnp.float32)    # (1,)

    x_flat = x.reshape(B, C, HW)                     # free reshape of contiguous NCHW

    vmem_need = (2 * c_tile * HW * 4                 # double-buffered x block
                 + 2 * HW * 4                        # double-buffered out block
                 + 2 * LP * 4                        # scratch
                 + (1 << 20))
    vmem_limit = int(min(max(2 * vmem_need, 32 << 20), 64 << 20))

    kernel = functools.partial(_fused_kernel, H=H, W=W, C=C, c_tile=c_tile, rpad=rpad)
    out = pl.pallas_call(
        kernel,
        out_shape=jax.ShapeDtypeStruct((B, 1, HW), jnp.float32),
        grid=(B, n_ci),
        in_specs=[
            pl.BlockSpec(memory_space=pltpu.MemorySpace.SMEM),   # conv weight (scalars)
            pl.BlockSpec(memory_space=pltpu.MemorySpace.SMEM),   # conv bias (scalar)
            pl.BlockSpec((1, c_tile, HW), lambda b, ci: (b, ci, 0)),
        ],
        out_specs=pl.BlockSpec((1, 1, HW), lambda b, ci: (b, 0, 0)),
        scratch_shapes=[pltpu.VMEM((2, LP), jnp.float32)],
        compiler_params=pltpu.CompilerParams(
            # Batch axis parallel; channel-reduction axis revisits the same
            # output block, so it is innermost and "arbitrary".
            dimension_semantics=("parallel", "arbitrary"),
            vmem_limit_bytes=vmem_limit),
        cost_estimate=pl.CostEstimate(
            flops=2 * B * C * HW + 2 * (2 * K * K) * B * HW,
            transcendentals=B * HW,
            bytes_accessed=B * C * HW * 4 + B * HW * 4 + (2 * K * K + 1) * 4),
    )(w_flat, b_flat, x_flat)
    return out.reshape(B, 1, H, W)


def reference(x, weight, bias):
    """Pure-JAX reference mirroring the PyTorch forward exactly."""
    B, _, H, W = x.shape
    mx = jnp.max(x, axis=1, keepdims=True)
    av = jnp.mean(x, axis=1, keepdims=True)
    m = jnp.concatenate([mx, av], axis=1)
    p = jnp.pad(m, ((0, 0), (0, 0), (PAD, PAD), (PAD, PAD)))
    acc = jnp.zeros((B, H, W), jnp.float32) + bias[0]
    for c in range(2):
        for di in range(K):
            for dj in range(K):
                acc = acc + weight[0, c, di, dj] * p[:, c, di:di + H, dj:dj + W]
    return jax.nn.sigmoid(acc)[:, None]


if __name__ == "__main__":
    key = jax.random.PRNGKey(0)
    kx, kw, kb = jax.random.split(key, 3)

    B, C, H, W = 2, 4, 16, 16
    x = jax.random.normal(kx, (B, C, H, W), dtype=jnp.float32)

    # Deterministic parameter init; shapes from nn.Conv2d(2, 1, 7, padding=3):
    # weight (1, 2, 7, 7), bias (1,). PyTorch-style uniform bound 1/sqrt(fan_in).
    fan_in = 2 * K * K
    bound = 1.0 / (fan_in ** 0.5)
    weight = jax.random.uniform(kw, (1, 2, K, K), jnp.float32, -bound, bound)
    bias = jax.random.uniform(kb, (1,), jnp.float32, -bound, bound)

    out = jax.block_until_ready(spatial_attention(x, weight, bias))
    ref = reference(x, weight, bias)

    assert out.shape == (B, 1, H, W), out.shape
    assert jnp.allclose(out, ref, atol=1e-5, rtol=1e-5), float(jnp.max(jnp.abs(out - ref)))
    print("KERNEL_OK")
</pallas_src>

<mosaic_0001>
module attributes {stable_mosaic.version = 11 : i64} {
  func.func @_fused_kernel(%arg0: i32, %arg1: i32, %arg2: memref<98xf32, #tpu.memory_space<smem>>, %arg3: memref<1xf32, #tpu.memory_space<smem>>, %arg4: memref<1x4x256xf32, #tpu.memory_space<vmem>>, %arg5: memref<1x1x256xf32, #tpu.memory_space<vmem>>, %arg6: memref<2x512xf32, #tpu.memory_space<vmem>>) attributes {dimension_semantics = [#tpu.dimension_semantics<parallel>, #tpu.dimension_semantics<arbitrary>], iteration_bounds = array<i64: 2, 1>, scalar_prefetch = 0 : i64, scratch_operands = 1 : i64, tpu.core_type = #tpu.core_type<tc>, window_params = [{transform_indices = @transform_0, window_bounds = array<i64: 98>}, {transform_indices = @transform_1, window_bounds = array<i64: 1>}, {transform_indices = @transform_2, window_bounds = array<i64: 1, 4, 256>}, {transform_indices = @transform_3, window_bounds = array<i64: 1, 1, 256>}]} {
    %c0 = arith.constant 0 : index
    %c0_0 = arith.constant 0 : index
    %c0_1 = arith.constant 0 : index
    %0 = vector.load %arg4[%c0, %c0_0, %c0_1] : memref<1x4x256xf32, #tpu.memory_space<vmem>>, vector<1x4x256xf32>
    %1 = vector.shape_cast %0 : vector<1x4x256xf32> to vector<4x256xf32>
    %cst = arith.constant dense<0xFF800000> : vector<256xf32>
    %2 = vector.multi_reduction <maximumf>, %1, %cst [0] : vector<4x256xf32> to vector<256xf32>
    %3 = vector.shape_cast %2 : vector<256xf32> to vector<1x256xf32>
    %cst_2 = arith.constant dense<0.000000e+00> : vector<256xf32>
    %4 = vector.multi_reduction <add>, %1, %cst_2 [0] : vector<4x256xf32> to vector<256xf32>
    %5 = vector.shape_cast %4 : vector<256xf32> to vector<1x256xf32>
    %c0_i32 = arith.constant 0 : i32
    %6 = arith.cmpi eq, %arg1, %c0_i32 : i32
    %7 = arith.extui %6 : i1 to i32
    %c0_i32_3 = arith.constant 0 : i32
    %8 = arith.cmpi ne, %7, %c0_i32_3 : i32
    scf.if %8 {
      %cst_8 = arith.constant 0.000000e+00 : f32
      %15 = vector.broadcast %cst_8 : f32 to vector<2x512xf32>
      %c0_9 = arith.constant 0 : index
      %c0_10 = arith.constant 0 : index
      %16 = vector.load %arg6[%c0_9, %c0_10] : memref<2x512xf32, #tpu.memory_space<vmem>>, vector<2x512xf32>
      tpu.vector_store %arg6[%c0_9, %c0_10], %15 {strides = array<i32>} : memref<2x512xf32, #tpu.memory_space<vmem>>, vector<2x512xf32>,
      %c0_11 = arith.constant 0 : index
      %c128 = arith.constant 128 : index
      %17 = vector.load %arg6[%c0_11, %c128] : memref<2x512xf32, #tpu.memory_space<vmem>>, vector<1x256xf32>
      tpu.vector_store %arg6[%c0_11, %c128], %3 {strides = array<i32>} : memref<2x512xf32, #tpu.memory_space<vmem>>, vector<1x256xf32>,
      %c1 = arith.constant 1 : index
      %c128_12 = arith.constant 128 : index
      %18 = vector.load %arg6[%c1, %c128_12] : memref<2x512xf32, #tpu.memory_space<vmem>>, vector<1x256xf32>
      tpu.vector_store %arg6[%c1, %c128_12], %5 {strides = array<i32>} : memref<2x512xf32, #tpu.memory_space<vmem>>, vector<1x256xf32>,
    } else {
    }
    %c0_i32_4 = arith.constant 0 : i32
    %9 = arith.cmpi ne, %arg1, %c0_i32_4 : i32
    %10 = arith.extui %9 : i1 to i32
    %c0_i32_5 = arith.constant 0 : i32
    %11 = arith.cmpi ne, %10, %c0_i32_5 : i32
    scf.if %11 {
      %c0_8 = arith.constant 0 : index
      %c128 = arith.constant 128 : index
      %15 = vector.load %arg6[%c0_8, %c128] : memref<2x512xf32, #tpu.memory_space<vmem>>, vector<1x256xf32>
      %16 = arith.maximumf %15, %3 : vector<1x256xf32>
      %c0_9 = arith.constant 0 : index
      %c128_10 = arith.constant 128 : index
      %17 = vector.load %arg6[%c0_9, %c128_10] : memref<2x512xf32, #tpu.memory_space<vmem>>, vector<1x256xf32>
      tpu.vector_store %arg6[%c0_9, %c128_10], %16 {strides = array<i32>} : memref<2x512xf32, #tpu.memory_space<vmem>>, vector<1x256xf32>,
      %c1 = arith.constant 1 : index
      %c128_11 = arith.constant 128 : index
      %18 = vector.load %arg6[%c1, %c128_11] : memref<2x512xf32, #tpu.memory_space<vmem>>, vector<1x256xf32>
      %19 = arith.addf %18, %5 : vector<1x256xf32>
      %c1_12 = arith.constant 1 : index
      %c128_13 = arith.constant 128 : index
      %20 = vector.load %arg6[%c1_12, %c128_13] : memref<2x512xf32, #tpu.memory_space<vmem>>, vector<1x256xf32>
      tpu.vector_store %arg6[%c1_12, %c128_13], %19 {strides = array<i32>} : memref<2x512xf32, #tpu.memory_space<vmem>>, vector<1x256xf32>,
    } else {
    }
    %c0_i32_6 = arith.constant 0 : i32
    %12 = arith.cmpi eq, %arg1, %c0_i32_6 : i32
    %13 = arith.extui %12 : i1 to i32
    %c0_i32_7 = arith.constant 0 : i32
    %14 = arith.cmpi ne, %13, %c0_i32_7 : i32
    scf.if %14 {
      %c0_8 = arith.constant 0 : index
      %15 = memref.load %arg2[%c0_8] : memref<98xf32, #tpu.memory_space<smem>>
      %c1 = arith.constant 1 : index
      %16 = memref.load %arg2[%c1] : memref<98xf32, #tpu.memory_space<smem>>
      %c2 = arith.constant 2 : index
      %17 = memref.load %arg2[%c2] : memref<98xf32, #tpu.memory_space<smem>>
      %c3 = arith.constant 3 : index
      %18 = memref.load %arg2[%c3] : memref<98xf32, #tpu.memory_space<smem>>
      %c4 = arith.constant 4 : index
      %19 = memref.load %arg2[%c4] : memref<98xf32, #tpu.memory_space<smem>>
      %c5 = arith.constant 5 : index
      %20 = memref.load %arg2[%c5] : memref<98xf32, #tpu.memory_space<smem>>
      %c6 = arith.constant 6 : index
      %21 = memref.load %arg2[%c6] : memref<98xf32, #tpu.memory_space<smem>>
      %c7 = arith.constant 7 : index
      %22 = memref.load %arg2[%c7] : memref<98xf32, #tpu.memory_space<smem>>
      %c8 = arith.constant 8 : index
      %23 = memref.load %arg2[%c8] : memref<98xf32, #tpu.memory_space<smem>>
      %c9 = arith.constant 9 : index
      %24 = memref.load %arg2[%c9] : memref<98xf32, #tpu.memory_space<smem>>
      %c10 = arith.constant 10 : index
      %25 = memref.load %arg2[%c10] : memref<98xf32, #tpu.memory_space<smem>>
      %c11 = arith.constant 11 : index
      %26 = memref.load %arg2[%c11] : memref<98xf32, #tpu.memory_space<smem>>
      %c12 = arith.constant 12 : index
      %27 = memref.load %arg2[%c12] : memref<98xf32, #tpu.memory_space<smem>>
      %c13 = arith.constant 13 : index
      %28 = memref.load %arg2[%c13] : memref<98xf32, #tpu.memory_space<smem>>
      %c14 = arith.constant 14 : index
      %29 = memref.load %arg2[%c14] : memref<98xf32, #tpu.memory_space<smem>>
      %c15 = arith.constant 15 : index
      %30 = memref.load %arg2[%c15] : memref<98xf32, #tpu.memory_space<smem>>
      %c16 = arith.constant 16 : index
      %31 = memref.load %arg2[%c16] : memref<98xf32, #tpu.memory_space<smem>>
      %c17 = arith.constant 17 : index
      %32 = memref.load %arg2[%c17] : memref<98xf32, #tpu.memory_space<smem>>
      %c18 = arith.constant 18 : index
      %33 = memref.load %arg2[%c18] : memref<98xf32, #tpu.memory_space<smem>>
      %c19 = arith.constant 19 : index
      %34 = memref.load %arg2[%c19] : memref<98xf32, #tpu.memory_space<smem>>
      %c20 = arith.constant 20 : index
      %35 = memref.load %arg2[%c20] : memref<98xf32, #tpu.memory_space<smem>>
      %c21 = arith.constant 21 : index
      %36 = memref.load %arg2[%c21] : memref<98xf32, #tpu.memory_space<smem>>
      %c22 = arith.constant 22 : index
      %37 = memref.load %arg2[%c22] : memref<98xf32, #tpu.memory_space<smem>>
      %c23 = arith.constant 23 : index
      %38 = memref.load %arg2[%c23] : memref<98xf32, #tpu.memory_space<smem>>
      %c24 = arith.constant 24 : index
      %39 = memref.load %arg2[%c24] : memref<98xf32, #tpu.memory_space<smem>>
      %c25 = arith.constant 25 : index
      %40 = memref.load %arg2[%c25] : memref<98xf32, #tpu.memory_space<smem>>
      %c26 = arith.constant 26 : index
      %41 = memref.load %arg2[%c26] : memref<98xf32, #tpu.memory_space<smem>>
      %c27 = arith.constant 27 : index
      %42 = memref.load %arg2[%c27] : memref<98xf32, #tpu.memory_space<smem>>
      %c28 = arith.constant 28 : index
      %43 = memref.load %arg2[%c28] : memref<98xf32, #tpu.memory_space<smem>>
      %c29 = arith.constant 29 : index
      %44 = memref.load %arg2[%c29] : memref<98xf32, #tpu.memory_space<smem>>
      %c30 = arith.constant 30 : index
      %45 = memref.load %arg2[%c30] : memref<98xf32, #tpu.memory_space<smem>>
      %c31 = arith.constant 31 : index
      %46 = memref.load %arg2[%c31] : memref<98xf32, #tpu.memory_space<smem>>
      %c32 = arith.constant 32 : index
      %47 = memref.load %arg2[%c32] : memref<98xf32, #tpu.memory_space<smem>>
      %c33 = arith.constant 33 : index
      %48 = memref.load %arg2[%c33] : memref<98xf32, #tpu.memory_space<smem>>
      %c34 = arith.constant 34 : index
      %49 = memref.load %arg2[%c34] : memref<98xf32, #tpu.memory_space<smem>>
      %c35 = arith.constant 35 : index
      %50 = memref.load %arg2[%c35] : memref<98xf32, #tpu.memory_space<smem>>
      %c36 = arith.constant 36 : index
      %51 = memref.load %arg2[%c36] : memref<98xf32, #tpu.memory_space<smem>>
      %c37 = arith.constant 37 : index
      %52 = memref.load %arg2[%c37] : memref<98xf32, #tpu.memory_space<smem>>
      %c38 = arith.constant 38 : index
      %53 = memref.load %arg2[%c38] : memref<98xf32, #tpu.memory_space<smem>>
      %c39 = arith.constant 39 : index
      %54 = memref.load %arg2[%c39] : memref<98xf32, #tpu.memory_space<smem>>
      %c40 = arith.constant 40 : index
      %55 = memref.load %arg2[%c40] : memref<98xf32, #tpu.memory_space<smem>>
      %c41 = arith.constant 41 : index
      %56 = memref.load %arg2[%c41] : memref<98xf32, #tpu.memory_space<smem>>
      %c42 = arith.constant 42 : index
      %57 = memref.load %arg2[%c42] : memref<98xf32, #tpu.memory_space<smem>>
      %c43 = arith.constant 43 : index
      %58 = memref.load %arg2[%c43] : memref<98xf32, #tpu.memory_space<smem>>
      %c44 = arith.constant 44 : index
      %59 = memref.load %arg2[%c44] : memref<98xf32, #tpu.memory_space<smem>>
      %c45 = arith.constant 45 : index
      %60 = memref.load %arg2[%c45] : memref<98xf32, #tpu.memory_space<smem>>
      %c46 = arith.constant 46 : index
      %61 = memref.load %arg2[%c46] : memref<98xf32, #tpu.memory_space<smem>>
      %c47 = arith.constant 47 : index
      %62 = memref.load %arg2[%c47] : memref<98xf32, #tpu.memory_space<smem>>
      %c48 = arith.constant 48 : index
      %63 = memref.load %arg2[%c48] : memref<98xf32, #tpu.memory_space<smem>>
      %c49 = arith.constant 49 : index
      %64 = memref.load %arg2[%c49] : memref<98xf32, #tpu.memory_space<smem>>
      %c50 = arith.constant 50 : index
      %65 = memref.load %arg2[%c50] : memref<98xf32, #tpu.memory_space<smem>>
      %c51 = arith.constant 51 : index
      %66 = memref.load %arg2[%c51] : memref<98xf32, #tpu.memory_space<smem>>
      %c52 = arith.constant 52 : index
      %67 = memref.load %arg2[%c52] : memref<98xf32, #tpu.memory_space<smem>>
      %c53 = arith.constant 53 : index
      %68 = memref.load %arg2[%c53] : memref<98xf32, #tpu.memory_space<smem>>
      %c54 = arith.constant 54 : index
      %69 = memref.load %arg2[%c54] : memref<98xf32, #tpu.memory_space<smem>>
      %c55 = arith.constant 55 : index
      %70 = memref.load %arg2[%c55] : memref<98xf32, #tpu.memory_space<smem>>
      %c56 = arith.constant 56 : index
      %71 = memref.load %arg2[%c56] : memref<98xf32, #tpu.memory_space<smem>>
      %c57 = arith.constant 57 : index
      %72 = memref.load %arg2[%c57] : memref<98xf32, #tpu.memory_space<smem>>
      %c58 = arith.constant 58 : index
      %73 = memref.load %arg2[%c58] : memref<98xf32, #tpu.memory_space<smem>>
      %c59 = arith.constant 59 : index
      %74 = memref.load %arg2[%c59] : memref<98xf32, #tpu.memory_space<smem>>
      %c60 = arith.constant 60 : index
      %75 = memref.load %arg2[%c60] : memref<98xf32, #tpu.memory_space<smem>>
      %c61 = arith.constant 61 : index
      %76 = memref.load %arg2[%c61] : memref<98xf32, #tpu.memory_space<smem>>
      %c62 = arith.constant 62 : index
      %77 = memref.load %arg2[%c62] : memref<98xf32, #tpu.memory_space<smem>>
      %c63 = arith.constant 63 : index
      %78 = memref.load %arg2[%c63] : memref<98xf32, #tpu.memory_space<smem>>
      %c64 = arith.constant 64 : index
      %79 = memref.load %arg2[%c64] : memref<98xf32, #tpu.memory_space<smem>>
      %c65 = arith.constant 65 : index
      %80 = memref.load %arg2[%c65] : memref<98xf32, #tpu.memory_space<smem>>
      %c66 = arith.constant 66 : index
      %81 = memref.load %arg2[%c66] : memref<98xf32, #tpu.memory_space<smem>>
      %c67 = arith.constant 67 : index
      %82 = memref.load %arg2[%c67] : memref<98xf32, #tpu.memory_space<smem>>
      %c68 = arith.constant 68 : index
      %83 = memref.load %arg2[%c68] : memref<98xf32, #tpu.memory_space<smem>>
      %c69 = arith.constant 69 : index
      %84 = memref.load %arg2[%c69] : memref<98xf32, #tpu.memory_space<smem>>
      %c70 = arith.constant 70 : index
      %85 = memref.load %arg2[%c70] : memref<98xf32, #tpu.memory_space<smem>>
      %c71 = arith.constant 71 : index
      %86 = memref.load %arg2[%c71] : memref<98xf32, #tpu.memory_space<smem>>
      %c72 = arith.constant 72 : index
      %87 = memref.load %arg2[%c72] : memref<98xf32, #tpu.memory_space<smem>>
      %c73 = arith.constant 73 : index
      %88 = memref.load %arg2[%c73] : memref<98xf32, #tpu.memory_space<smem>>
      %c74 = arith.constant 74 : index
      %89 = memref.load %arg2[%c74] : memref<98xf32, #tpu.memory_space<smem>>
      %c75 = arith.constant 75 : index
      %90 = memref.load %arg2[%c75] : memref<98xf32, #tpu.memory_space<smem>>
      %c76 = arith.constant 76 : index
      %91 = memref.load %arg2[%c76] : memref<98xf32, #tpu.memory_space<smem>>
      %c77 = arith.constant 77 : index
      %92 = memref.load %arg2[%c77] : memref<98xf32, #tpu.memory_space<smem>>
      %c78 = arith.constant 78 : index
      %93 = memref.load %arg2[%c78] : memref<98xf32, #tpu.memory_space<smem>>
      %c79 = arith.constant 79 : index
      %94 = memref.load %arg2[%c79] : memref<98xf32, #tpu.memory_space<smem>>
      %c80 = arith.constant 80 : index
      %95 = memref.load %arg2[%c80] : memref<98xf32, #tpu.memory_space<smem>>
      %c81 = arith.constant 81 : index
      %96 = memref.load %arg2[%c81] : memref<98xf32, #tpu.memory_space<smem>>
      %c82 = arith.constant 82 : index
      %97 = memref.load %arg2[%c82] : memref<98xf32, #tpu.memory_space<smem>>
      %c83 = arith.constant 83 : index
      %98 = memref.load %arg2[%c83] : memref<98xf32, #tpu.memory_space<smem>>
      %c84 = arith.constant 84 : index
      %99 = memref.load %arg2[%c84] : memref<98xf32, #tpu.memory_space<smem>>
      %c85 = arith.constant 85 : index
      %100 = memref.load %arg2[%c85] : memref<98xf32, #tpu.memory_space<smem>>
      %c86 = arith.constant 86 : index
      %101 = memref.load %arg2[%c86] : memref<98xf32, #tpu.memory_space<smem>>
      %c87 = arith.constant 87 : index
      %102 = memref.load %arg2[%c87] : memref<98xf32, #tpu.memory_space<smem>>
      %c88 = arith.constant 88 : index
      %103 = memref.load %arg2[%c88] : memref<98xf32, #tpu.memory_space<smem>>
      %c89 = arith.constant 89 : index
      %104 = memref.load %arg2[%c89] : memref<98xf32, #tpu.memory_space<smem>>
      %c90 = arith.constant 90 : index
      %105 = memref.load %arg2[%c90] : memref<98xf32, #tpu.memory_space<smem>>
      %c91 = arith.constant 91 : index
      %106 = memref.load %arg2[%c91] : memref<98xf32, #tpu.memory_space<smem>>
      %c92 = arith.constant 92 : index
      %107 = memref.load %arg2[%c92] : memref<98xf32, #tpu.memory_space<smem>>
      %c93 = arith.constant 93 : index
      %108 = memref.load %arg2[%c93] : memref<98xf32, #tpu.memory_space<smem>>
      %c94 = arith.constant 94 : index
      %109 = memref.load %arg2[%c94] : memref<98xf32, #tpu.memory_space<smem>>
      %c95 = arith.constant 95 : index
      %110 = memref.load %arg2[%c95] : memref<98xf32, #tpu.memory_space<smem>>
      %c96 = arith.constant 96 : index
      %111 = memref.load %arg2[%c96] : memref<98xf32, #tpu.memory_space<smem>>
      %c97 = arith.constant 97 : index
      %112 = memref.load %arg2[%c97] : memref<98xf32, #tpu.memory_space<smem>>
      %c0_9 = arith.constant 0 : index
      %113 = memref.load %arg3[%c0_9] : memref<1xf32, #tpu.memory_space<smem>>
      %114 = tpu.iota {dimensions = array<i32: 1>} : vector<1x256xi32>
      %c16_i32 = arith.constant 16 : i32
      %c0_i32_10 = arith.constant 0 : i32
      %115 = arith.cmpi eq, %c16_i32, %c0_i32_10 : i32
      %c1_i32 = arith.constant 1 : i32
      %116 = arith.select %115, %c1_i32, %c16_i32 : i32
      %117 = vector.broadcast %116 : i32 to vector<1x256xi32>
      %118 = arith.remsi %114, %117 : vector<1x256xi32>
      %c0_i32_11 = arith.constant 0 : i32
      %119 = vector.broadcast %c0_i32_11 : i32 to vector<1x256xi32>
      %120 = arith.cmpi ne, %118, %119 : vector<1x256xi32>
      %c0_i32_12 = arith.constant 0 : i32
      %121 = vector.broadcast %c0_i32_12 : i32 to vector<1x256xi32>
      %122 = arith.cmpi slt, %118, %121 : vector<1x256xi32>
      %c0_i32_13 = arith.constant 0 : i32
      %123 = arith.cmpi slt, %116, %c0_i32_13 : i32
      %124 = vector.broadcast %123 : i1 to vector<1x256xi1>
      %125 = vector.broadcast %124 : vector<1x256xi1> to vector<1x256xi1>
      %126 = arith.xori %122, %125 : vector<1x256xi1>
      %127 = arith.andi %126, %120 : vector<1x256xi1>
      %128 = vector.broadcast %116 : i32 to vector<1x256xi32>
      %129 = arith.addi %118, %128 : vector<1x256xi32>
      %130 = arith.select %127, %129, %118 : vector<1x256xi1>, vector<1x256xi32>
      %131 = vector.broadcast %113 : f32 to vector<1x256xf32>
      %c-3_i32 = arith.constant -3 : i32
      %132 = vector.broadcast %c-3_i32 : i32 to vector<1x256xi32>
      %133 = arith.addi %130, %132 : vector<1x256xi32>
      %c0_i32_14 = arith.constant 0 : i32
      %134 = vector.broadcast %c0_i32_14 : i32 to vector<1x256xi32>
      %135 = arith.cmpi sge, %133, %134 : vector<1x256xi32>
      %c16_i32_15 = arith.constant 16 : i32
      %136 = vector.broadcast %c16_i32_15 : i32 to vector<1x256xi32>
      %137 = arith.cmpi slt, %133, %136 : vector<1x256xi32>
      %138 = arith.andi %135, %137 : vector<1x256xi1>
      %139 = arith.extui %138 : vector<1x256xi1> to vector<1x256xi32>
      %140 = arith.sitofp %139 : vector<1x256xi32> to vector<1x256xf32>
      %cst_16 = arith.constant 0.000000e+00 : f32
      %141 = vector.broadcast %cst_16 : f32 to vector<1x256xf32>
      %cst_17 = arith.constant 0.000000e+00 : f32
      %142 = vector.broadcast %cst_17 : f32 to vector<1x256xf32>
      %c0_18 = arith.constant 0 : index
      %c77_19 = arith.constant 77 : index
      %143 = vector.load %arg6[%c0_18, %c77_19] : memref<2x512xf32, #tpu.memory_space<vmem>>, vector<1x256xf32>
      %144 = vector.broadcast %15 : f32 to vector<1x256xf32>
      %145 = arith.mulf %144, %143 : vector<1x256xf32>
      %146 = arith.addf %142, %145 : vector<1x256xf32>
      %c0_20 = arith.constant 0 : index
      %c93_21 = arith.constant 93 : index
      %147 = vector.load %arg6[%c0_20, %c93_21] : memref<2x512xf32, #tpu.memory_space<vmem>>, vector<1x256xf32>
      %148 = vector.broadcast %22 : f32 to vector<1x256xf32>
      %149 = arith.mulf %148, %147 : vector<1x256xf32>
      %150 = arith.addf %146, %149 : vector<1x256xf32>
      %c0_22 = arith.constant 0 : index
      %c109 = arith.constant 109 : index
      %151 = vector.load %arg6[%c0_22, %c109] : memref<2x512xf32, #tpu.memory_space<vmem>>, vector<1x256xf32>
      %152 = vector.broadcast %29 : f32 to vector<1x256xf32>
      %153 = arith.mulf %152, %151 : vector<1x256xf32>
      %154 = arith.addf %150, %153 : vector<1x256xf32>
      %c0_23 = arith.constant 0 : index
      %c125 = arith.constant 125 : index
      %155 = vector.load %arg6[%c0_23, %c125] : memref<2x512xf32, #tpu.memory_space<vmem>>, vector<1x256xf32>
      %156 = vector.broadcast %36 : f32 to vector<1x256xf32>
      %157 = arith.mulf %156, %155 : vector<1x256xf32>
      %158 = arith.addf %154, %157 : vector<1x256xf32>
      %c0_24 = arith.constant 0 : index
      %c141 = arith.constant 141 : index
      %159 = vector.load %arg6[%c0_24, %c141] : memref<2x512xf32, #tpu.memory_space<vmem>>, vector<1x256xf32>
      %160 = vector.broadcast %43 : f32 to vector<1x256xf32>
      %161 = arith.mulf %160, %159 : vector<1x256xf32>
      %162 = arith.addf %158, %161 : vector<1x256xf32>
      %c0_25 = arith.constant 0 : index
      %c157 = arith.constant 157 : index
      %163 = vector.load %arg6[%c0_25, %c157] : memref<2x512xf32, #tpu.memory_space<vmem>>, vector<1x256xf32>
      %164 = vector.broadcast %50 : f32 to vector<1x256xf32>
      %165 = arith.mulf %164, %163 : vector<1x256xf32>
      %166 = arith.addf %162, %165 : vector<1x256xf32>
      %c0_26 = arith.constant 0 : index
      %c173 = arith.constant 173 : index
      %167 = vector.load %arg6[%c0_26, %c173] : memref<2x512xf32, #tpu.memory_space<vmem>>, vector<1x256xf32>
      %168 = vector.broadcast %57 : f32 to vector<1x256xf32>
      %169 = arith.mulf %168, %167 : vector<1x256xf32>
      %170 = arith.addf %166, %169 : vector<1x256xf32>
      %171 = arith.addf %141, %170 : vector<1x256xf32>
      %cst_27 = arith.constant 0.000000e+00 : f32
      %172 = vector.broadcast %cst_27 : f32 to vector<1x256xf32>
      %c1_28 = arith.constant 1 : index
      %c77_29 = arith.constant 77 : index
      %173 = vector.load %arg6[%c1_28, %c77_29] : memref<2x512xf32, #tpu.memory_space<vmem>>, vector<1x256xf32>
      %174 = vector.broadcast %64 : f32 to vector<1x256xf32>
      %175 = arith.mulf %174, %173 : vector<1x256xf32>
      %176 = arith.addf %172, %175 : vector<1x256xf32>
      %c1_30 = arith.constant 1 : index
      %c93_31 = arith.constant 93 : index
      %177 = vector.load %arg6[%c1_30, %c93_31] : memref<2x512xf32, #tpu.memory_space<vmem>>, vector<1x256xf32>
      %178 = vector.broadcast %71 : f32 to vector<1x256xf32>
      %179 = arith.mulf %178, %177 : vector<1x256xf32>
      %180 = arith.addf %176, %179 : vector<1x256xf32>
      %c1_32 = arith.constant 1 : index
      %c109_33 = arith.constant 109 : index
      %181 = vector.load %arg6[%c1_32, %c109_33] : memref<2x512xf32, #tpu.memory_space<vmem>>, vector<1x256xf32>
      %182 = vector.broadcast %78 : f32 to vector<1x256xf32>
      %183 = arith.mulf %182, %181 : vector<1x256xf32>
      %184 = arith.addf %180, %183 : vector<1x256xf32>
      %c1_34 = arith.constant 1 : index
      %c125_35 = arith.constant 125 : index
      %185 = vector.load %arg6[%c1_34, %c125_35] : memref<2x512xf32, #tpu.memory_space<vmem>>, vector<1x256xf32>
      %186 = vector.broadcast %85 : f32 to vector<1x256xf32>
      %187 = arith.mulf %186, %185 : vector<1x256xf32>
      %188 = arith.addf %184, %187 : vector<1x256xf32>
      %c1_36 = arith.constant 1 : index
      %c141_37 = arith.constant 141 : index
      %189 = vector.load %arg6[%c1_36, %c141_37] : memref<2x512xf32, #tpu.memory_space<vmem>>, vector<1x256xf32>
      %190 = vector.broadcast %92 : f32 to vector<1x256xf32>
      %191 = arith.mulf %190, %189 : vector<1x256xf32>
      %192 = arith.addf %188, %191 : vector<1x256xf32>
      %c1_38 = arith.constant 1 : index
      %c157_39 = arith.constant 157 : index
      %193 = vector.load %arg6[%c1_38, %c157_39] : memref<2x512xf32, #tpu.memory_space<vmem>>, vector<1x256xf32>
      %194 = vector.broadcast %99 : f32 to vector<1x256xf32>
      %195 = arith.mulf %194, %193 : vector<1x256xf32>
      %196 = arith.addf %192, %195 : vector<1x256xf32>
      %c1_40 = arith.constant 1 : index
      %c173_41 = arith.constant 173 : index
      %197 = vector.load %arg6[%c1_40, %c173_41] : memref<2x512xf32, #tpu.memory_space<vmem>>, vector<1x256xf32>
      %198 = vector.broadcast %106 : f32 to vector<1x256xf32>
      %199 = arith.mulf %198, %197 : vector<1x256xf32>
      %200 = arith.addf %196, %199 : vector<1x256xf32>
      %201 = arith.addf %171, %200 : vector<1x256xf32>
      %202 = arith.mulf %140, %201 : vector<1x256xf32>
      %203 = arith.addf %131, %202 : vector<1x256xf32>
      %c-2_i32 = arith.constant -2 : i32
      %204 = vector.broadcast %c-2_i32 : i32 to vector<1x256xi32>
      %205 = arith.addi %130, %204 : vector<1x256xi32>
      %c0_i32_42 = arith.constant 0 : i32
      %206 = vector.broadcast %c0_i32_42 : i32 to vector<1x256xi32>
      %207 = arith.cmpi sge, %205, %206 : vector<1x256xi32>
      %c16_i32_43 = arith.constant 16 : i32
      %208 = vector.broadcast %c16_i32_43 : i32 to vector<1x256xi32>
      %209 = arith.cmpi slt, %205, %208 : vector<1x256xi32>
      %210 = arith.andi %207, %209 : vector<1x256xi1>
      %211 = arith.extui %210 : vector<1x256xi1> to vector<1x256xi32>
      %212 = arith.sitofp %211 : vector<1x256xi32> to vector<1x256xf32>
      %cst_44 = arith.constant 0.000000e+00 : f32
      %213 = vector.broadcast %cst_44 : f32 to vector<1x256xf32>
      %cst_45 = arith.constant 0.000000e+00 : f32
      %214 = vector.broadcast %cst_45 : f32 to vector<1x256xf32>
      %c0_46 = arith.constant 0 : index
      %c78_47 = arith.constant 78 : index
      %215 = vector.load %arg6[%c0_46, %c78_47] : memref<2x512xf32, #tpu.memory_space<vmem>>, vector<1x256xf32>
      %216 = vector.broadcast %16 : f32 to vector<1x256xf32>
      %217 = arith.mulf %216, %215 : vector<1x256xf32>
      %218 = arith.addf %214, %217 : vector<1x256xf32>
      %c0_48 = arith.constant 0 : index
      %c94_49 = arith.constant 94 : index
      %219 = vector.load %arg6[%c0_48, %c94_49] : memref<2x512xf32, #tpu.memory_space<vmem>>, vector<1x256xf32>
      %220 = vector.broadcast %23 : f32 to vector<1x256xf32>
      %221 = arith.mulf %220, %219 : vector<1x256xf32>
      %222 = arith.addf %218, %221 : vector<1x256xf32>
      %c0_50 = arith.constant 0 : index
      %c110 = arith.constant 110 : index
      %223 = vector.load %arg6[%c0_50, %c110] : memref<2x512xf32, #tpu.memory_space<vmem>>, vector<1x256xf32>
      %224 = vector.broadcast %30 : f32 to vector<1x256xf32>
      %225 = arith.mulf %224, %223 : vector<1x256xf32>
      %226 = arith.addf %222, %225 : vector<1x256xf32>
      %c0_51 = arith.constant 0 : index
      %c126 = arith.constant 126 : index
      %227 = vector.load %arg6[%c0_51, %c126] : memref<2x512xf32, #tpu.memory_space<vmem>>, vector<1x256xf32>
      %228 = vector.broadcast %37 : f32 to vector<1x256xf32>
      %229 = arith.mulf %228, %227 : vector<1x256xf32>
      %230 = arith.addf %226, %229 : vector<1x256xf32>
      %c0_52 = arith.constant 0 : index
      %c142 = arith.constant 142 : index
      %231 = vector.load %arg6[%c0_52, %c142] : memref<2x512xf32, #tpu.memory_space<vmem>>, vector<1x256xf32>
      %232 = vector.broadcast %44 : f32 to vector<1x256xf32>
      %233 = arith.mulf %232, %231 : vector<1x256xf32>
      %234 = arith.addf %230, %233 : vector<1x256xf32>
      %c0_53 = arith.constant 0 : index
      %c158 = arith.constant 158 : index
      %235 = vector.load %arg6[%c0_53, %c158] : memref<2x512xf32, #tpu.memory_space<vmem>>, vector<1x256xf32>
      %236 = vector.broadcast %51 : f32 to vector<1x256xf32>
      %237 = arith.mulf %236, %235 : vector<1x256xf32>
      %238 = arith.addf %234, %237 : vector<1x256xf32>
      %c0_54 = arith.constant 0 : index
      %c174 = arith.constant 174 : index
      %239 = vector.load %arg6[%c0_54, %c174] : memref<2x512xf32, #tpu.memory_space<vmem>>, vector<1x256xf32>
      %240 = vector.broadcast %58 : f32 to vector<1x256xf32>
      %241 = arith.mulf %240, %239 : vector<1x256xf32>
      %242 = arith.addf %238, %241 : vector<1x256xf32>
      %243 = arith.addf %213, %242 : vector<1x256xf32>
      %cst_55 = arith.constant 0.000000e+00 : f32
      %244 = vector.broadcast %cst_55 : f32 to vector<1x256xf32>
      %c1_56 = arith.constant 1 : index
      %c78_57 = arith.constant 78 : index
      %245 = vector.load %arg6[%c1_56, %c78_57] : memref<2x512xf32, #tpu.memory_space<vmem>>, vector<1x256xf32>
      %246 = vector.broadcast %65 : f32 to vector<1x256xf32>
      %247 = arith.mulf %246, %245 : vector<1x256xf32>
      %248 = arith.addf %244, %247 : vector<1x256xf32>
      %c1_58 = arith.constant 1 : index
      %c94_59 = arith.constant 94 : index
      %249 = vector.load %arg6[%c1_58, %c94_59] : memref<2x512xf32, #tpu.memory_space<vmem>>, vector<1x256xf32>
      %250 = vector.broadcast %72 : f32 to vector<1x256xf32>
      %251 = arith.mulf %250, %249 : vector<1x256xf32>
      %252 = arith.addf %248, %251 : vector<1x256xf32>
      %c1_60 = arith.constant 1 : index
      %c110_61 = arith.constant 110 : index
      %253 = vector.load %arg6[%c1_60, %c110_61] : memref<2x512xf32, #tpu.memory_space<vmem>>, vector<1x256xf32>
      %254 = vector.broadcast %79 : f32 to vector<1x256xf32>
      %255 = arith.mulf %254, %253 : vector<1x256xf32>
      %256 = arith.addf %252, %255 : vector<1x256xf32>
      %c1_62 = arith.constant 1 : index
      %c126_63 = arith.constant 126 : index
      %257 = vector.load %arg6[%c1_62, %c126_63] : memref<2x512xf32, #tpu.memory_space<vmem>>, vector<1x256xf32>
      %258 = vector.broadcast %86 : f32 to vector<1x256xf32>
      %259 = arith.mulf %258, %257 : vector<1x256xf32>
      %260 = arith.addf %256, %259 : vector<1x256xf32>
      %c1_64 = arith.constant 1 : index
      %c142_65 = arith.constant 142 : index
      %261 = vector.load %arg6[%c1_64, %c142_65] : memref<2x512xf32, #tpu.memory_space<vmem>>, vector<1x256xf32>
      %262 = vector.broadcast %93 : f32 to vector<1x256xf32>
      %263 = arith.mulf %262, %261 : vector<1x256xf32>
      %264 = arith.addf %260, %263 : vector<1x256xf32>
      %c1_66 = arith.constant 1 : index
      %c158_67 = arith.constant 158 : index
      %265 = vector.load %arg6[%c1_66, %c158_67] : memref<2x512xf32, #tpu.memory_space<vmem>>, vector<1x256xf32>
      %266 = vector.broadcast %100 : f32 to vector<1x256xf32>
      %267 = arith.mulf %266, %265 : vector<1x256xf32>
      %268 = arith.addf %264, %267 : vector<1x256xf32>
      %c1_68 = arith.constant 1 : index
      %c174_69 = arith.constant 174 : index
      %269 = vector.load %arg6[%c1_68, %c174_69] : memref<2x512xf32, #tpu.memory_space<vmem>>, vector<1x256xf32>
      %270 = vector.broadcast %107 : f32 to vector<1x256xf32>
      %271 = arith.mulf %270, %269 : vector<1x256xf32>
      %272 = arith.addf %268, %271 : vector<1x256xf32>
      %273 = arith.addf %243, %272 : vector<1x256xf32>
      %274 = arith.mulf %212, %273 : vector<1x256xf32>
      %275 = arith.addf %203, %274 : vector<1x256xf32>
      %c-1_i32 = arith.constant -1 : i32
      %276 = vector.broadcast %c-1_i32 : i32 to vector<1x256xi32>
      %277 = arith.addi %130, %276 : vector<1x256xi32>
      %c0_i32_70 = arith.constant 0 : i32
      %278 = vector.broadcast %c0_i32_70 : i32 to vector<1x256xi32>
      %279 = arith.cmpi sge, %277, %278 : vector<1x256xi32>
      %c16_i32_71 = arith.constant 16 : i32
      %280 = vector.broadcast %c16_i32_71 : i32 to vector<1x256xi32>
      %281 = arith.cmpi slt, %277, %280 : vector<1x256xi32>
      %282 = arith.andi %279, %281 : vector<1x256xi1>
      %283 = arith.extui %282 : vector<1x256xi1> to vector<1x256xi32>
      %284 = arith.sitofp %283 : vector<1x256xi32> to vector<1x256xf32>
      %cst_72 = arith.constant 0.000000e+00 : f32
      %285 = vector.broadcast %cst_72 : f32 to vector<1x256xf32>
      %cst_73 = arith.constant 0.000000e+00 : f32
      %286 = vector.broadcast %cst_73 : f32 to vector<1x256xf32>
      %c0_74 = arith.constant 0 : index
      %c79_75 = arith.constant 79 : index
      %287 = vector.load %arg6[%c0_74, %c79_75] : memref<2x512xf32, #tpu.memory_space<vmem>>, vector<1x256xf32>
      %288 = vector.broadcast %17 : f32 to vector<1x256xf32>
      %289 = arith.mulf %288, %287 : vector<1x256xf32>
      %290 = arith.addf %286, %289 : vector<1x256xf32>
      %c0_76 = arith.constant 0 : index
      %c95_77 = arith.constant 95 : index
      %291 = vector.load %arg6[%c0_76, %c95_77] : memref<2x512xf32, #tpu.memory_space<vmem>>, vector<1x256xf32>
      %292 = vector.broadcast %24 : f32 to vector<1x256xf32>
      %293 = arith.mulf %292, %291 : vector<1x256xf32>
      %294 = arith.addf %290, %293 : vector<1x256xf32>
      %c0_78 = arith.constant 0 : index
      %c111 = arith.constant 111 : index
      %295 = vector.load %arg6[%c0_78, %c111] : memref<2x512xf32, #tpu.memory_space<vmem>>, vector<1x256xf32>
      %296 = vector.broadcast %31 : f32 to vector<1x256xf32>
      %297 = arith.mulf %296, %295 : vector<1x256xf32>
      %298 = arith.addf %294, %297 : vector<1x256xf32>
      %c0_79 = arith.constant 0 : index
      %c127 = arith.constant 127 : index
      %299 = vector.load %arg6[%c0_79, %c127] : memref<2x512xf32, #tpu.memory_space<vmem>>, vector<1x256xf32>
      %300 = vector.broadcast %38 : f32 to vector<1x256xf32>
      %301 = arith.mulf %300, %299 : vector<1x256xf32>
      %302 = arith.addf %298, %301 : vector<1x256xf32>
      %c0_80 = arith.constant 0 : index
      %c143 = arith.constant 143 : index
      %303 = vector.load %arg6[%c0_80, %c143] : memref<2x512xf32, #tpu.memory_space<vmem>>, vector<1x256xf32>
      %304 = vector.broadcast %45 : f32 to vector<1x256xf32>
      %305 = arith.mulf %304, %303 : vector<1x256xf32>
      %306 = arith.addf %302, %305 : vector<1x256xf32>
      %c0_81 = arith.constant 0 : index
      %c159 = arith.constant 159 : index
      %307 = vector.load %arg6[%c0_81, %c159] : memref<2x512xf32, #tpu.memory_space<vmem>>, vector<1x256xf32>
      %308 = vector.broadcast %52 : f32 to vector<1x256xf32>
      %309 = arith.mulf %308, %307 : vector<1x256xf32>
      %310 = arith.addf %306, %309 : vector<1x256xf32>
      %c0_82 = arith.constant 0 : index
      %c175 = arith.constant 175 : index
      %311 = vector.load %arg6[%c0_82, %c175] : memref<2x512xf32, #tpu.memory_space<vmem>>, vector<1x256xf32>
      %312 = vector.broadcast %59 : f32 to vector<1x256xf32>
      %313 = arith.mulf %312, %311 : vector<1x256xf32>
      %314 = arith.addf %310, %313 : vector<1x256xf32>
      %315 = arith.addf %285, %314 : vector<1x256xf32>
      %cst_83 = arith.constant 0.000000e+00 : f32
      %316 = vector.broadcast %cst_83 : f32 to vector<1x256xf32>
      %c1_84 = arith.constant 1 : index
      %c79_85 = arith.constant 79 : index
      %317 = vector.load %arg6[%c1_84, %c79_85] : memref<2x512xf32, #tpu.memory_space<vmem>>, vector<1x256xf32>
      %318 = vector.broadcast %66 : f32 to vector<1x256xf32>
      %319 = arith.mulf %318, %317 : vector<1x256xf32>
      %320 = arith.addf %316, %319 : vector<1x256xf32>
      %c1_86 = arith.constant 1 : index
      %c95_87 = arith.constant 95 : index
      %321 = vector.load %arg6[%c1_86, %c95_87] : memref<2x512xf32, #tpu.memory_space<vmem>>, vector<1x256xf32>
      %322 = vector.broadcast %73 : f32 to vector<1x256xf32>
      %323 = arith.mulf %322, %321 : vector<1x256xf32>
      %324 = arith.addf %320, %323 : vector<1x256xf32>
      %c1_88 = arith.constant 1 : index
      %c111_89 = arith.constant 111 : index
      %325 = vector.load %arg6[%c1_88, %c111_89] : memref<2x512xf32, #tpu.memory_space<vmem>>, vector<1x256xf32>
      %326 = vector.broadcast %80 : f32 to vector<1x256xf32>
      %327 = arith.mulf %326, %325 : vector<1x256xf32>
      %328 = arith.addf %324, %327 : vector<1x256xf32>
      %c1_90 = arith.constant 1 : index
      %c127_91 = arith.constant 127 : index
      %329 = vector.load %arg6[%c1_90, %c127_91] : memref<2x512xf32, #tpu.memory_space<vmem>>, vector<1x256xf32>
      %330 = vector.broadcast %87 : f32 to vector<1x256xf32>
      %331 = arith.mulf %330, %329 : vector<1x256xf32>
      %332 = arith.addf %328, %331 : vector<1x256xf32>
      %c1_92 = arith.constant 1 : index
      %c143_93 = arith.constant 143 : index
      %333 = vector.load %arg6[%c1_92, %c143_93] : memref<2x512xf32, #tpu.memory_space<vmem>>, vector<1x256xf32>
      %334 = vector.broadcast %94 : f32 to vector<1x256xf32>
      %335 = arith.mulf %334, %333 : vector<1x256xf32>
      %336 = arith.addf %332, %335 : vector<1x256xf32>
      %c1_94 = arith.constant 1 : index
      %c159_95 = arith.constant 159 : index
      %337 = vector.load %arg6[%c1_94, %c159_95] : memref<2x512xf32, #tpu.memory_space<vmem>>, vector<1x256xf32>
      %338 = vector.broadcast %101 : f32 to vector<1x256xf32>
      %339 = arith.mulf %338, %337 : vector<1x256xf32>
      %340 = arith.addf %336, %339 : vector<1x256xf32>
      %c1_96 = arith.constant 1 : index
      %c175_97 = arith.constant 175 : index
      %341 = vector.load %arg6[%c1_96, %c175_97] : memref<2x512xf32, #tpu.memory_space<vmem>>, vector<1x256xf32>
      %342 = vector.broadcast %108 : f32 to vector<1x256xf32>
      %343 = arith.mulf %342, %341 : vector<1x256xf32>
      %344 = arith.addf %340, %343 : vector<1x256xf32>
      %345 = arith.addf %315, %344 : vector<1x256xf32>
      %346 = arith.mulf %284, %345 : vector<1x256xf32>
      %347 = arith.addf %275, %346 : vector<1x256xf32>
      %c0_i32_98 = arith.constant 0 : i32
      %348 = vector.broadcast %c0_i32_98 : i32 to vector<1x256xi32>
      %349 = arith.addi %130, %348 : vector<1x256xi32>
      %c0_i32_99 = arith.constant 0 : i32
      %350 = vector.broadcast %c0_i32_99 : i32 to vector<1x256xi32>
      %351 = arith.cmpi sge, %349, %350 : vector<1x256xi32>
      %c16_i32_100 = arith.constant 16 : i32
      %352 = vector.broadcast %c16_i32_100 : i32 to vector<1x256xi32>
      %353 = arith.cmpi slt, %349, %352 : vector<1x256xi32>
      %354 = arith.andi %351, %353 : vector<1x256xi1>
      %355 = arith.extui %354 : vector<1x256xi1> to vector<1x256xi32>
      %356 = arith.sitofp %355 : vector<1x256xi32> to vector<1x256xf32>
      %cst_101 = arith.constant 0.000000e+00 : f32
      %357 = vector.broadcast %cst_101 : f32 to vector<1x256xf32>
      %cst_102 = arith.constant 0.000000e+00 : f32
      %358 = vector.broadcast %cst_102 : f32 to vector<1x256xf32>
      %c0_103 = arith.constant 0 : index
      %c80_104 = arith.constant 80 : index
      %359 = vector.load %arg6[%c0_103, %c80_104] : memref<2x512xf32, #tpu.memory_space<vmem>>, vector<1x256xf32>
      %360 = vector.broadcast %18 : f32 to vector<1x256xf32>
      %361 = arith.mulf %360, %359 : vector<1x256xf32>
      %362 = arith.addf %358, %361 : vector<1x256xf32>
      %c0_105 = arith.constant 0 : index
      %c96_106 = arith.constant 96 : index
      %363 = vector.load %arg6[%c0_105, %c96_106] : memref<2x512xf32, #tpu.memory_space<vmem>>, vector<1x256xf32>
      %364 = vector.broadcast %25 : f32 to vector<1x256xf32>
      %365 = arith.mulf %364, %363 : vector<1x256xf32>
      %366 = arith.addf %362, %365 : vector<1x256xf32>
      %c0_107 = arith.constant 0 : index
      %c112 = arith.constant 112 : index
      %367 = vector.load %arg6[%c0_107, %c112] : memref<2x512xf32, #tpu.memory_space<vmem>>, vector<1x256xf32>
      %368 = vector.broadcast %32 : f32 to vector<1x256xf32>
      %369 = arith.mulf %368, %367 : vector<1x256xf32>
      %370 = arith.addf %366, %369 : vector<1x256xf32>
      %c0_108 = arith.constant 0 : index
      %c128 = arith.constant 128 : index
      %371 = vector.load %arg6[%c0_108, %c128] : memref<2x512xf32, #tpu.memory_space<vmem>>, vector<1x256xf32>
      %372 = vector.broadcast %39 : f32 to vector<1x256xf32>
      %373 = arith.mulf %372, %371 : vector<1x256xf32>
      %374 = arith.addf %370, %373 : vector<1x256xf32>
      %c0_109 = arith.constant 0 : index
      %c144 = arith.constant 144 : index
      %375 = vector.load %arg6[%c0_109, %c144] : memref<2x512xf32, #tpu.memory_space<vmem>>, vector<1x256xf32>
      %376 = vector.broadcast %46 : f32 to vector<1x256xf32>
      %377 = arith.mulf %376, %375 : vector<1x256xf32>
      %378 = arith.addf %374, %377 : vector<1x256xf32>
      %c0_110 = arith.constant 0 : index
      %c160 = arith.constant 160 : index
      %379 = vector.load %arg6[%c0_110, %c160] : memref<2x512xf32, #tpu.memory_space<vmem>>, vector<1x256xf32>
      %380 = vector.broadcast %53 : f32 to vector<1x256xf32>
      %381 = arith.mulf %380, %379 : vector<1x256xf32>
      %382 = arith.addf %378, %381 : vector<1x256xf32>
      %c0_111 = arith.constant 0 : index
      %c176 = arith.constant 176 : index
      %383 = vector.load %arg6[%c0_111, %c176] : memref<2x512xf32, #tpu.memory_space<vmem>>, vector<1x256xf32>
      %384 = vector.broadcast %60 : f32 to vector<1x256xf32>
      %385 = arith.mulf %384, %383 : vector<1x256xf32>
      %386 = arith.addf %382, %385 : vector<1x256xf32>
      %387 = arith.addf %357, %386 : vector<1x256xf32>
      %cst_112 = arith.constant 0.000000e+00 : f32
      %388 = vector.broadcast %cst_112 : f32 to vector<1x256xf32>
      %c1_113 = arith.constant 1 : index
      %c80_114 = arith.constant 80 : index
      %389 = vector.load %arg6[%c1_113, %c80_114] : memref<2x512xf32, #tpu.memory_space<vmem>>, vector<1x256xf32>
      %390 = vector.broadcast %67 : f32 to vector<1x256xf32>
      %391 = arith.mulf %390, %389 : vector<1x256xf32>
      %392 = arith.addf %388, %391 : vector<1x256xf32>
      %c1_115 = arith.constant 1 : index
      %c96_116 = arith.constant 96 : index
      %393 = vector.load %arg6[%c1_115, %c96_116] : memref<2x512xf32, #tpu.memory_space<vmem>>, vector<1x256xf32>
      %394 = vector.broadcast %74 : f32 to vector<1x256xf32>
      %395 = arith.mulf %394, %393 : vector<1x256xf32>
      %396 = arith.addf %392, %395 : vector<1x256xf32>
      %c1_117 = arith.constant 1 : index
      %c112_118 = arith.constant 112 : index
      %397 = vector.load %arg6[%c1_117, %c112_118] : memref<2x512xf32, #tpu.memory_space<vmem>>, vector<1x256xf32>
      %398 = vector.broadcast %81 : f32 to vector<1x256xf32>
      %399 = arith.mulf %398, %397 : vector<1x256xf32>
      %400 = arith.addf %396, %399 : vector<1x256xf32>
      %c1_119 = arith.constant 1 : index
      %c128_120 = arith.constant 128 : index
      %401 = vector.load %arg6[%c1_119, %c128_120] : memref<2x512xf32, #tpu.memory_space<vmem>>, vector<1x256xf32>
      %402 = vector.broadcast %88 : f32 to vector<1x256xf32>
      %403 = arith.mulf %402, %401 : vector<1x256xf32>
      %404 = arith.addf %400, %403 : vector<1x256xf32>
      %c1_121 = arith.constant 1 : index
      %c144_122 = arith.constant 144 : index
      %405 = vector.load %arg6[%c1_121, %c144_122] : memref<2x512xf32, #tpu.memory_space<vmem>>, vector<1x256xf32>
      %406 = vector.broadcast %95 : f32 to vector<1x256xf32>
      %407 = arith.mulf %406, %405 : vector<1x256xf32>
      %408 = arith.addf %404, %407 : vector<1x256xf32>
      %c1_123 = arith.constant 1 : index
      %c160_124 = arith.constant 160 : index
      %409 = vector.load %arg6[%c1_123, %c160_124] : memref<2x512xf32, #tpu.memory_space<vmem>>, vector<1x256xf32>
      %410 = vector.broadcast %102 : f32 to vector<1x256xf32>
      %411 = arith.mulf %410, %409 : vector<1x256xf32>
      %412 = arith.addf %408, %411 : vector<1x256xf32>
      %c1_125 = arith.constant 1 : index
      %c176_126 = arith.constant 176 : index
      %413 = vector.load %arg6[%c1_125, %c176_126] : memref<2x512xf32, #tpu.memory_space<vmem>>, vector<1x256xf32>
      %414 = vector.broadcast %109 : f32 to vector<1x256xf32>
      %415 = arith.mulf %414, %413 : vector<1x256xf32>
      %416 = arith.addf %412, %415 : vector<1x256xf32>
      %417 = arith.addf %387, %416 : vector<1x256xf32>
      %418 = arith.mulf %356, %417 : vector<1x256xf32>
      %419 = arith.addf %347, %418 : vector<1x256xf32>
      %c1_i32_127 = arith.constant 1 : i32
      %420 = vector.broadcast %c1_i32_127 : i32 to vector<1x256xi32>
      %421 = arith.addi %130, %420 : vector<1x256xi32>
      %c0_i32_128 = arith.constant 0 : i32
      %422 = vector.broadcast %c0_i32_128 : i32 to vector<1x256xi32>
      %423 = arith.cmpi sge, %421, %422 : vector<1x256xi32>
      %c16_i32_129 = arith.constant 16 : i32
      %424 = vector.broadcast %c16_i32_129 : i32 to vector<1x256xi32>
      %425 = arith.cmpi slt, %421, %424 : vector<1x256xi32>
      %426 = arith.andi %423, %425 : vector<1x256xi1>
      %427 = arith.extui %426 : vector<1x256xi1> to vector<1x256xi32>
      %428 = arith.sitofp %427 : vector<1x256xi32> to vector<1x256xf32>
      %cst_130 = arith.constant 0.000000e+00 : f32
      %429 = vector.broadcast %cst_130 : f32 to vector<1x256xf32>
      %cst_131 = arith.constant 0.000000e+00 : f32
      %430 = vector.broadcast %cst_131 : f32 to vector<1x256xf32>
      %c0_132 = arith.constant 0 : index
      %c81_133 = arith.constant 81 : index
      %431 = vector.load %arg6[%c0_132, %c81_133] : memref<2x512xf32, #tpu.memory_space<vmem>>, vector<1x256xf32>
      %432 = vector.broadcast %19 : f32 to vector<1x256xf32>
      %433 = arith.mulf %432, %431 : vector<1x256xf32>
      %434 = arith.addf %430, %433 : vector<1x256xf32>
      %c0_134 = arith.constant 0 : index
      %c97_135 = arith.constant 97 : index
      %435 = vector.load %arg6[%c0_134, %c97_135] : memref<2x512xf32, #tpu.memory_space<vmem>>, vector<1x256xf32>
      %436 = vector.broadcast %26 : f32 to vector<1x256xf32>
      %437 = arith.mulf %436, %435 : vector<1x256xf32>
      %438 = arith.addf %434, %437 : vector<1x256xf32>
      %c0_136 = arith.constant 0 : index
      %c113 = arith.constant 113 : index
      %439 = vector.load %arg6[%c0_136, %c113] : memref<2x512xf32, #tpu.memory_space<vmem>>, vector<1x256xf32>
      %440 = vector.broadcast %33 : f32 to vector<1x256xf32>
      %441 = arith.mulf %440, %439 : vector<1x256xf32>
      %442 = arith.addf %438, %441 : vector<1x256xf32>
      %c0_137 = arith.constant 0 : index
      %c129 = arith.constant 129 : index
      %443 = vector.load %arg6[%c0_137, %c129] : memref<2x512xf32, #tpu.memory_space<vmem>>, vector<1x256xf32>
      %444 = vector.broadcast %40 : f32 to vector<1x256xf32>
      %445 = arith.mulf %444, %443 : vector<1x256xf32>
      %446 = arith.addf %442, %445 : vector<1x256xf32>
      %c0_138 = arith.constant 0 : index
      %c145 = arith.constant 145 : index
      %447 = vector.load %arg6[%c0_138, %c145] : memref<2x512xf32, #tpu.memory_space<vmem>>, vector<1x256xf32>
      %448 = vector.broadcast %47 : f32 to vector<1x256xf32>
      %449 = arith.mulf %448, %447 : vector<1x256xf32>
      %450 = arith.addf %446, %449 : vector<1x256xf32>
      %c0_139 = arith.constant 0 : index
      %c161 = arith.constant 161 : index
      %451 = vector.load %arg6[%c0_139, %c161] : memref<2x512xf32, #tpu.memory_space<vmem>>, vector<1x256xf32>
      %452 = vector.broadcast %54 : f32 to vector<1x256xf32>
      %453 = arith.mulf %452, %451 : vector<1x256xf32>
      %454 = arith.addf %450, %453 : vector<1x256xf32>
      %c0_140 = arith.constant 0 : index
      %c177 = arith.constant 177 : index
      %455 = vector.load %arg6[%c0_140, %c177] : memref<2x512xf32, #tpu.memory_space<vmem>>, vector<1x256xf32>
      %456 = vector.broadcast %61 : f32 to vector<1x256xf32>
      %457 = arith.mulf %456, %455 : vector<1x256xf32>
      %458 = arith.addf %454, %457 : vector<1x256xf32>
      %459 = arith.addf %429, %458 : vector<1x256xf32>
      %cst_141 = arith.constant 0.000000e+00 : f32
      %460 = vector.broadcast %cst_141 : f32 to vector<1x256xf32>
      %c1_142 = arith.constant 1 : index
      %c81_143 = arith.constant 81 : index
      %461 = vector.load %arg6[%c1_142, %c81_143] : memref<2x512xf32, #tpu.memory_space<vmem>>, vector<1x256xf32>
      %462 = vector.broadcast %68 : f32 to vector<1x256xf32>
      %463 = arith.mulf %462, %461 : vector<1x256xf32>
      %464 = arith.addf %460, %463 : vector<1x256xf32>
      %c1_144 = arith.constant 1 : index
      %c97_145 = arith.constant 97 : index
      %465 = vector.load %arg6[%c1_144, %c97_145] : memref<2x512xf32, #tpu.memory_space<vmem>>, vector<1x256xf32>
      %466 = vector.broadcast %75 : f32 to vector<1x256xf32>
      %467 = arith.mulf %466, %465 : vector<1x256xf32>
      %468 = arith.addf %464, %467 : vector<1x256xf32>
      %c1_146 = arith.constant 1 : index
      %c113_147 = arith.constant 113 : index
      %469 = vector.load %arg6[%c1_146, %c113_147] : memref<2x512xf32, #tpu.memory_space<vmem>>, vector<1x256xf32>
      %470 = vector.broadcast %82 : f32 to vector<1x256xf32>
      %471 = arith.mulf %470, %469 : vector<1x256xf32>
      %472 = arith.addf %468, %471 : vector<1x256xf32>
      %c1_148 = arith.constant 1 : index
      %c129_149 = arith.constant 129 : index
      %473 = vector.load %arg6[%c1_148, %c129_149] : memref<2x512xf32, #tpu.memory_space<vmem>>, vector<1x256xf32>
      %474 = vector.broadcast %89 : f32 to vector<1x256xf32>
      %475 = arith.mulf %474, %473 : vector<1x256xf32>
      %476 = arith.addf %472, %475 : vector<1x256xf32>
      %c1_150 = arith.constant 1 : index
      %c145_151 = arith.constant 145 : index
      %477 = vector.load %arg6[%c1_150, %c145_151] : memref<2x512xf32, #tpu.memory_space<vmem>>, vector<1x256xf32>
      %478 = vector.broadcast %96 : f32 to vector<1x256xf32>
      %479 = arith.mulf %478, %477 : vector<1x256xf32>
      %480 = arith.addf %476, %479 : vector<1x256xf32>
      %c1_152 = arith.constant 1 : index
      %c161_153 = arith.constant 161 : index
      %481 = vector.load %arg6[%c1_152, %c161_153] : memref<2x512xf32, #tpu.memory_space<vmem>>, vector<1x256xf32>
      %482 = vector.broadcast %103 : f32 to vector<1x256xf32>
      %483 = arith.mulf %482, %481 : vector<1x256xf32>
      %484 = arith.addf %480, %483 : vector<1x256xf32>
      %c1_154 = arith.constant 1 : index
      %c177_155 = arith.constant 177 : index
      %485 = vector.load %arg6[%c1_154, %c177_155] : memref<2x512xf32, #tpu.memory_space<vmem>>, vector<1x256xf32>
      %486 = vector.broadcast %110 : f32 to vector<1x256xf32>
      %487 = arith.mulf %486, %485 : vector<1x256xf32>
      %488 = arith.addf %484, %487 : vector<1x256xf32>
      %489 = arith.addf %459, %488 : vector<1x256xf32>
      %490 = arith.mulf %428, %489 : vector<1x256xf32>
      %491 = arith.addf %419, %490 : vector<1x256xf32>
      %c2_i32 = arith.constant 2 : i32
      %492 = vector.broadcast %c2_i32 : i32 to vector<1x256xi32>
      %493 = arith.addi %130, %492 : vector<1x256xi32>
      %c0_i32_156 = arith.constant 0 : i32
      %494 = vector.broadcast %c0_i32_156 : i32 to vector<1x256xi32>
      %495 = arith.cmpi sge, %493, %494 : vector<1x256xi32>
      %c16_i32_157 = arith.constant 16 : i32
      %496 = vector.broadcast %c16_i32_157 : i32 to vector<1x256xi32>
      %497 = arith.cmpi slt, %493, %496 : vector<1x256xi32>
      %498 = arith.andi %495, %497 : vector<1x256xi1>
      %499 = arith.extui %498 : vector<1x256xi1> to vector<1x256xi32>
      %500 = arith.sitofp %499 : vector<1x256xi32> to vector<1x256xf32>
      %cst_158 = arith.constant 0.000000e+00 : f32
      %501 = vector.broadcast %cst_158 : f32 to vector<1x256xf32>
      %cst_159 = arith.constant 0.000000e+00 : f32
      %502 = vector.broadcast %cst_159 : f32 to vector<1x256xf32>
      %c0_160 = arith.constant 0 : index
      %c82_161 = arith.constant 82 : index
      %503 = vector.load %arg6[%c0_160, %c82_161] : memref<2x512xf32, #tpu.memory_space<vmem>>, vector<1x256xf32>
      %504 = vector.broadcast %20 : f32 to vector<1x256xf32>
      %505 = arith.mulf %504, %503 : vector<1x256xf32>
      %506 = arith.addf %502, %505 : vector<1x256xf32>
      %c0_162 = arith.constant 0 : index
      %c98 = arith.constant 98 : index
      %507 = vector.load %arg6[%c0_162, %c98] : memref<2x512xf32, #tpu.memory_space<vmem>>, vector<1x256xf32>
      %508 = vector.broadcast %27 : f32 to vector<1x256xf32>
      %509 = arith.mulf %508, %507 : vector<1x256xf32>
      %510 = arith.addf %506, %509 : vector<1x256xf32>
      %c0_163 = arith.constant 0 : index
      %c114 = arith.constant 114 : index
      %511 = vector.load %arg6[%c0_163, %c114] : memref<2x512xf32, #tpu.memory_space<vmem>>, vector<1x256xf32>
      %512 = vector.broadcast %34 : f32 to vector<1x256xf32>
      %513 = arith.mulf %512, %511 : vector<1x256xf32>
      %514 = arith.addf %510, %513 : vector<1x256xf32>
      %c0_164 = arith.constant 0 : index
      %c130 = arith.constant 130 : index
      %515 = vector.load %arg6[%c0_164, %c130] : memref<2x512xf32, #tpu.memory_space<vmem>>, vector<1x256xf32>
      %516 = vector.broadcast %41 : f32 to vector<1x256xf32>
      %517 = arith.mulf %516, %515 : vector<1x256xf32>
      %518 = arith.addf %514, %517 : vector<1x256xf32>
      %c0_165 = arith.constant 0 : index
      %c146 = arith.constant 146 : index
      %519 = vector.load %arg6[%c0_165, %c146] : memref<2x512xf32, #tpu.memory_space<vmem>>, vector<1x256xf32>
      %520 = vector.broadcast %48 : f32 to vector<1x256xf32>
      %521 = arith.mulf %520, %519 : vector<1x256xf32>
      %522 = arith.addf %518, %521 : vector<1x256xf32>
      %c0_166 = arith.constant 0 : index
      %c162 = arith.constant 162 : index
      %523 = vector.load %arg6[%c0_166, %c162] : memref<2x512xf32, #tpu.memory_space<vmem>>, vector<1x256xf32>
      %524 = vector.broadcast %55 : f32 to vector<1x256xf32>
      %525 = arith.mulf %524, %523 : vector<1x256xf32>
      %526 = arith.addf %522, %525 : vector<1x256xf32>
      %c0_167 = arith.constant 0 : index
      %c178 = arith.constant 178 : index
      %527 = vector.load %arg6[%c0_167, %c178] : memref<2x512xf32, #tpu.memory_space<vmem>>, vector<1x256xf32>
      %528 = vector.broadcast %62 : f32 to vector<1x256xf32>
      %529 = arith.mulf %528, %527 : vector<1x256xf32>
      %530 = arith.addf %526, %529 : vector<1x256xf32>
      %531 = arith.addf %501, %530 : vector<1x256xf32>
      %cst_168 = arith.constant 0.000000e+00 : f32
      %532 = vector.broadcast %cst_168 : f32 to vector<1x256xf32>
      %c1_169 = arith.constant 1 : index
      %c82_170 = arith.constant 82 : index
      %533 = vector.load %arg6[%c1_169, %c82_170] : memref<2x512xf32, #tpu.memory_space<vmem>>, vector<1x256xf32>
      %534 = vector.broadcast %69 : f32 to vector<1x256xf32>
      %535 = arith.mulf %534, %533 : vector<1x256xf32>
      %536 = arith.addf %532, %535 : vector<1x256xf32>
      %c1_171 = arith.constant 1 : index
      %c98_172 = arith.constant 98 : index
      %537 = vector.load %arg6[%c1_171, %c98_172] : memref<2x512xf32, #tpu.memory_space<vmem>>, vector<1x256xf32>
      %538 = vector.broadcast %76 : f32 to vector<1x256xf32>
      %539 = arith.mulf %538, %537 : vector<1x256xf32>
      %540 = arith.addf %536, %539 : vector<1x256xf32>
      %c1_173 = arith.constant 1 : index
      %c114_174 = arith.constant 114 : index
      %541 = vector.load %arg6[%c1_173, %c114_174] : memref<2x512xf32, #tpu.memory_space<vmem>>, vector<1x256xf32>
      %542 = vector.broadcast %83 : f32 to vector<1x256xf32>
      %543 = arith.mulf %542, %541 : vector<1x256xf32>
      %544 = arith.addf %540, %543 : vector<1x256xf32>
      %c1_175 = arith.constant 1 : index
      %c130_176 = arith.constant 130 : index
      %545 = vector.load %arg6[%c1_175, %c130_176] : memref<2x512xf32, #tpu.memory_space<vmem>>, vector<1x256xf32>
      %546 = vector.broadcast %90 : f32 to vector<1x256xf32>
      %547 = arith.mulf %546, %545 : vector<1x256xf32>
      %548 = arith.addf %544, %547 : vector<1x256xf32>
      %c1_177 = arith.constant 1 : index
      %c146_178 = arith.constant 146 : index
      %549 = vector.load %arg6[%c1_177, %c146_178] : memref<2x512xf32, #tpu.memory_space<vmem>>, vector<1x256xf32>
      %550 = vector.broadcast %97 : f32 to vector<1x256xf32>
      %551 = arith.mulf %550, %549 : vector<1x256xf32>
      %552 = arith.addf %548, %551 : vector<1x256xf32>
      %c1_179 = arith.constant 1 : index
      %c162_180 = arith.constant 162 : index
      %553 = vector.load %arg6[%c1_179, %c162_180] : memref<2x512xf32, #tpu.memory_space<vmem>>, vector<1x256xf32>
      %554 = vector.broadcast %104 : f32 to vector<1x256xf32>
      %555 = arith.mulf %554, %553 : vector<1x256xf32>
      %556 = arith.addf %552, %555 : vector<1x256xf32>
      %c1_181 = arith.constant 1 : index
      %c178_182 = arith.constant 178 : index
      %557 = vector.load %arg6[%c1_181, %c178_182] : memref<2x512xf32, #tpu.memory_space<vmem>>, vector<1x256xf32>
      %558 = vector.broadcast %111 : f32 to vector<1x256xf32>
      %559 = arith.mulf %558, %557 : vector<1x256xf32>
      %560 = arith.addf %556, %559 : vector<1x256xf32>
      %561 = arith.addf %531, %560 : vector<1x256xf32>
      %562 = arith.mulf %500, %561 : vector<1x256xf32>
      %563 = arith.addf %491, %562 : vector<1x256xf32>
      %c3_i32 = arith.constant 3 : i32
      %564 = vector.broadcast %c3_i32 : i32 to vector<1x256xi32>
      %565 = arith.addi %130, %564 : vector<1x256xi32>
      %c0_i32_183 = arith.constant 0 : i32
      %566 = vector.broadcast %c0_i32_183 : i32 to vector<1x256xi32>
      %567 = arith.cmpi sge, %565, %566 : vector<1x256xi32>
      %c16_i32_184 = arith.constant 16 : i32
      %568 = vector.broadcast %c16_i32_184 : i32 to vector<1x256xi32>
      %569 = arith.cmpi slt, %565, %568 : vector<1x256xi32>
      %570 = arith.andi %567, %569 : vector<1x256xi1>
      %571 = arith.extui %570 : vector<1x256xi1> to vector<1x256xi32>
      %572 = arith.sitofp %571 : vector<1x256xi32> to vector<1x256xf32>
      %cst_185 = arith.constant 0.000000e+00 : f32
      %573 = vector.broadcast %cst_185 : f32 to vector<1x256xf32>
      %cst_186 = arith.constant 0.000000e+00 : f32
      %574 = vector.broadcast %cst_186 : f32 to vector<1x256xf32>
      %c0_187 = arith.constant 0 : index
      %c83_188 = arith.constant 83 : index
      %575 = vector.load %arg6[%c0_187, %c83_188] : memref<2x512xf32, #tpu.memory_space<vmem>>, vector<1x256xf32>
      %576 = vector.broadcast %21 : f32 to vector<1x256xf32>
      %577 = arith.mulf %576, %575 : vector<1x256xf32>
      %578 = arith.addf %574, %577 : vector<1x256xf32>
      %c0_189 = arith.constant 0 : index
      %c99 = arith.constant 99 : index
      %579 = vector.load %arg6[%c0_189, %c99] : memref<2x512xf32, #tpu.memory_space<vmem>>, vector<1x256xf32>
      %580 = vector.broadcast %28 : f32 to vector<1x256xf32>
      %581 = arith.mulf %580, %579 : vector<1x256xf32>
      %582 = arith.addf %578, %581 : vector<1x256xf32>
      %c0_190 = arith.constant 0 : index
      %c115 = arith.constant 115 : index
      %583 = vector.load %arg6[%c0_190, %c115] : memref<2x512xf32, #tpu.memory_space<vmem>>, vector<1x256xf32>
      %584 = vector.broadcast %35 : f32 to vector<1x256xf32>
      %585 = arith.mulf %584, %583 : vector<1x256xf32>
      %586 = arith.addf %582, %585 : vector<1x256xf32>
      %c0_191 = arith.constant 0 : index
      %c131 = arith.constant 131 : index
      %587 = vector.load %arg6[%c0_191, %c131] : memref<2x512xf32, #tpu.memory_space<vmem>>, vector<1x256xf32>
      %588 = vector.broadcast %42 : f32 to vector<1x256xf32>
      %589 = arith.mulf %588, %587 : vector<1x256xf32>
      %590 = arith.addf %586, %589 : vector<1x256xf32>
      %c0_192 = arith.constant 0 : index
      %c147 = arith.constant 147 : index
      %591 = vector.load %arg6[%c0_192, %c147] : memref<2x512xf32, #tpu.memory_space<vmem>>, vector<1x256xf32>
      %592 = vector.broadcast %49 : f32 to vector<1x256xf32>
      %593 = arith.mulf %592, %591 : vector<1x256xf32>
      %594 = arith.addf %590, %593 : vector<1x256xf32>
      %c0_193 = arith.constant 0 : index
      %c163 = arith.constant 163 : index
      %595 = vector.load %arg6[%c0_193, %c163] : memref<2x512xf32, #tpu.memory_space<vmem>>, vector<1x256xf32>
      %596 = vector.broadcast %56 : f32 to vector<1x256xf32>
      %597 = arith.mulf %596, %595 : vector<1x256xf32>
      %598 = arith.addf %594, %597 : vector<1x256xf32>
      %c0_194 = arith.constant 0 : index
      %c179 = arith.constant 179 : index
      %599 = vector.load %arg6[%c0_194, %c179] : memref<2x512xf32, #tpu.memory_space<vmem>>, vector<1x256xf32>
      %600 = vector.broadcast %63 : f32 to vector<1x256xf32>
      %601 = arith.mulf %600, %599 : vector<1x256xf32>
      %602 = arith.addf %598, %601 : vector<1x256xf32>
      %603 = arith.addf %573, %602 : vector<1x256xf32>
      %cst_195 = arith.constant 0.000000e+00 : f32
      %604 = vector.broadcast %cst_195 : f32 to vector<1x256xf32>
      %c1_196 = arith.constant 1 : index
      %c83_197 = arith.constant 83 : index
      %605 = vector.load %arg6[%c1_196, %c83_197] : memref<2x512xf32, #tpu.memory_space<vmem>>, vector<1x256xf32>
      %606 = vector.broadcast %70 : f32 to vector<1x256xf32>
      %607 = arith.mulf %606, %605 : vector<1x256xf32>
      %608 = arith.addf %604, %607 : vector<1x256xf32>
      %c1_198 = arith.constant 1 : index
      %c99_199 = arith.constant 99 : index
      %609 = vector.load %arg6[%c1_198, %c99_199] : memref<2x512xf32, #tpu.memory_space<vmem>>, vector<1x256xf32>
      %610 = vector.broadcast %77 : f32 to vector<1x256xf32>
      %611 = arith.mulf %610, %609 : vector<1x256xf32>
      %612 = arith.addf %608, %611 : vector<1x256xf32>
      %c1_200 = arith.constant 1 : index
      %c115_201 = arith.constant 115 : index
      %613 = vector.load %arg6[%c1_200, %c115_201] : memref<2x512xf32, #tpu.memory_space<vmem>>, vector<1x256xf32>
      %614 = vector.broadcast %84 : f32 to vector<1x256xf32>
      %615 = arith.mulf %614, %613 : vector<1x256xf32>
      %616 = arith.addf %612, %615 : vector<1x256xf32>
      %c1_202 = arith.constant 1 : index
      %c131_203 = arith.constant 131 : index
      %617 = vector.load %arg6[%c1_202, %c131_203] : memref<2x512xf32, #tpu.memory_space<vmem>>, vector<1x256xf32>
      %618 = vector.broadcast %91 : f32 to vector<1x256xf32>
      %619 = arith.mulf %618, %617 : vector<1x256xf32>
      %620 = arith.addf %616, %619 : vector<1x256xf32>
      %c1_204 = arith.constant 1 : index
      %c147_205 = arith.constant 147 : index
      %621 = vector.load %arg6[%c1_204, %c147_205] : memref<2x512xf32, #tpu.memory_space<vmem>>, vector<1x256xf32>
      %622 = vector.broadcast %98 : f32 to vector<1x256xf32>
      %623 = arith.mulf %622, %621 : vector<1x256xf32>
      %624 = arith.addf %620, %623 : vector<1x256xf32>
      %c1_206 = arith.constant 1 : index
      %c163_207 = arith.constant 163 : index
      %625 = vector.load %arg6[%c1_206, %c163_207] : memref<2x512xf32, #tpu.memory_space<vmem>>, vector<1x256xf32>
      %626 = vector.broadcast %105 : f32 to vector<1x256xf32>
      %627 = arith.mulf %626, %625 : vector<1x256xf32>
      %628 = arith.addf %624, %627 : vector<1x256xf32>
      %c1_208 = arith.constant 1 : index
      %c179_209 = arith.constant 179 : index
      %629 = vector.load %arg6[%c1_208, %c179_209] : memref<2x512xf32, #tpu.memory_space<vmem>>, vector<1x256xf32>
      %630 = vector.broadcast %112 : f32 to vector<1x256xf32>
      %631 = arith.mulf %630, %629 : vector<1x256xf32>
      %632 = arith.addf %628, %631 : vector<1x256xf32>
      %633 = arith.addf %603, %632 : vector<1x256xf32>
      %634 = arith.mulf %572, %633 : vector<1x256xf32>
      %635 = arith.addf %563, %634 : vector<1x256xf32>
      %636 = arith.negf %635 : vector<1x256xf32>
      %637 = math.exp %636 : vector<1x256xf32>
      %cst_210 = arith.constant 1.000000e+00 : f32
      %638 = vector.broadcast %cst_210 : f32 to vector<1x256xf32>
      %639 = arith.addf %638, %637 : vector<1x256xf32>
      %640 = arith.divf %638, %639 : vector<1x256xf32>
      %c0_211 = arith.constant 0 : index
      %c0_212 = arith.constant 0 : index
      %c0_213 = arith.constant 0 : index
      %641 = vector.load %arg5[%c0_211, %c0_212, %c0_213] : memref<1x1x256xf32, #tpu.memory_space<vmem>>, vector<1x1x256xf32>
      %642 = vector.shape_cast %641 : vector<1x1x256xf32> to vector<1x256xf32>
      %643 = vector.shape_cast %640 : vector<1x256xf32> to vector<1x1x256xf32>
      tpu.vector_store %arg5[%c0_211, %c0_212, %c0_213], %643 {strides = array<i32>} : memref<1x1x256xf32, #tpu.memory_space<vmem>>, vector<1x1x256xf32>,
    } else {
    }
    return
  }
  func.func @transform_0(%arg0: i32, %arg1: i32) -> i32 {
    %c0_i32 = arith.constant 0 : i32
    %c0_i32_0 = arith.constant 0 : i32
    return %c0_i32 : i32
  }
  func.func @transform_1(%arg0: i32, %arg1: i32) -> i32 {
    %c0_i32 = arith.constant 0 : i32
    %c0_i32_0 = arith.constant 0 : i32
    return %c0_i32 : i32
  }
  func.func @transform_2(%arg0: i32, %arg1: i32) -> (i32, i32, i32) {
    %c0_i32 = arith.constant 0 : i32
    %c0_i32_0 = arith.constant 0 : i32
    return %arg0, %arg1, %c0_i32 : i32, i32, i32
  }
  func.func @transform_3(%arg0: i32, %arg1: i32) -> (i32, i32, i32) {
    %c0_i32 = arith.constant 0 : i32
    %c0_i32_0 = arith.constant 0 : i32
    %c0_i32_1 = arith.constant 0 : i32
    return %arg0, %c0_i32, %c0_i32_0 : i32, i32, i32
  }
}

</mosaic_0001>

<llo_original>
// kernel: tpu_custom_call.1
$region0: #{tpu_custom_call.1}
  #allocation0 [shape = 'u32[]', space=smem, size = 0x4, offset = 0x4, fixed_abs, tag = 'smem constant byte address 0x4 - core index']
  #allocation1 [shape = 'u32[144,128]{1,0:T(1,128)}', space=vmem, size = 0x12000, scoped, tag = 'internal scratch']
  #allocation2 [shape = 'f32[2,512]{1,0:T(2,128)}', space=vmem, size = 0x1000, scoped, tag = 'scratch operand']
  #allocation3 [shape = 'f32[1]{0:T(128)S(6)}', space=smem, size = 0x200, scoped, tag = 'scoped memory for tpu_custom_call.1']
  %s0 = inlined_call_operand.vmem [shape: f32[98], index: 0, kind: input, shape index: {}]
  %s1 = inlined_call_operand.<no memory space> [shape: f32[1], index: 1, kind: input, shape index: {}]
  %s2 = inlined_call_operand.hbm [shape: f32[2,4,256], index: 2, kind: input, shape index: {}]
  %s3 = inlined_call_operand.hbm [shape: f32[2,1,256], index: 3, kind: output, shape index: {}]
  %s4 = sld [smem:[#allocation0]]
  $region65: #{tpu_custom_call.1} parent=0
    _
  %s6 = ssub.s32 1, %s4
  %s7 = scalar_select 0, %s6, %s4
  %8 = sst [smem:[#allocation3]] %s1
  $region1: #{tpu_custom_call.1} parent=0
    #allocation4 [shape = 'u8[512]{0}', space=smem, size = 0x200, scoped, tag = 'input window, operand 0, single buffered']
    #allocation5 [shape = 's32[2]{0}', space=sflag, size = 0x8, scoped, tag = 'scoped memory for tpu_custom_call.1']
    #allocation6 [shape = 's32[2]{0}', space=sflag, size = 0x8, scoped, tag = 'scoped memory for tpu_custom_call.1']
    #allocation7 [shape = 's32[2]{0}', space=sflag, size = 0x8, scoped, tag = 'scoped memory for tpu_custom_call.1']
    #allocation8 [shape = 'u8[8192]{0}', space=vmem, size = 0x2000, scoped, tag = 'input window, operand 2']
    #allocation9 [shape = 'u8[2048]{0}', space=vmem, size = 0x800, scoped, tag = 'output window, operand 0']
    %9 = vsyncpa [#allocation7], 0
    %10 = vsyncpa [#allocation5], 0
    %s11 = scalar_lea.sflag [#allocation5], 1
    %12 = vsyncpa %s11, 0
    %13 = vsyncpa [#allocation6], 0
    %s14 = scalar_lea.sflag [#allocation6], 1
    %15 = vsyncpa %s14, 0
    loop: start=0, step=1, limit=4
    $region2: #{tpu_custom_call.1} parent=1 // loop_pre_header
      _
    $region3: #{tpu_custom_call.1} parent=1 // loop_header
      %s17 = sphi 0, %s21
      %p18 = scmp.ge.s32.totalorder %s17, 4
      %s24 = sphi 0, %s36
      %s25 = sphi 0, %s32
      %s26 = sphi 0, %s24
      %s27 = sphi 0, %s25
      %s28 = sphi 0, %s26
      %s29 = sphi 0, %s27
      %s37 = sphi 0, %s37
      %s39 = sphi 0, %s37
      %s40 = sphi 0, %s39
      %s54 = sphi 0, %s40
      %s58 = sphi 0, %s58
      %s60 = sphi 0, %s58
      %s61 = sphi 0, %s60
      %s75 = sphi 0, %s61
      %s83 = sphi 0, %s85
      %s86 = sphi 0, %s83
      %s87 = sphi 0, %s86
      %s103 = sphi 0, %s87
      %s109 = sphi 0, %s111
      %s112 = sphi 0, %s109
      %s113 = sphi 0, %s112
      %s129 = sphi 0, %s113
    $region4: #{tpu_custom_call.1} parent=1 // loop_header_branch
      %20 = sbr.rel (%p18) target = $region8
    $region5: #{tpu_custom_call.1} parent=1 // loop_body
      %s22 = ssub.s32 %s17, 1
      %s23 = ssub.s32 %s17, 2
      %s30 = sadd.s32 1, %s25
      %p31 = scmp.ge.s32.totalorder %s30, 1
      %s32 = scalar_select %p31, 0, %s30
      %s33 = sadd.s32 1, %s24
      %s34 = scalar_select %p31, %s33, %s24
      %p35 = scmp.ge.s32.totalorder %s34, 2
      %s36 = scalar_select %p35, 0, %s34
      %s38 = sadd.s32 %s37, 1
      %p41 = scmp.eq.s32.totalorder %s17, 1
      %p42 = scmp.ne.s32.totalorder %s37, %s39
      %p43 = scmp.eq.s32.totalorder %s17, 0
      %p44 = por %p42, %p43
      %p45 = scmp.ne.s32.totalorder %s37, %s39
      %p46 = scmp.eq.s32.totalorder %s22, 1
      %p47 = por %p45, %p46
      %p48 = scmp.ne.s32.totalorder %s39, %s40
      %p49 = scmp.eq.s32.totalorder %s22, 0
      %p50 = por %p48, %p49
      %p51 = scmp.ne.s32.totalorder %s39, %s40
      %p52 = scmp.eq.s32.totalorder %s23, 1
      %p53 = por %p51, %p52
      %p55 = scmp.ne.s32.totalorder %s40, %s54
      %p56 = scmp.eq.s32.totalorder %s23, 0
      %p57 = por %p55, %p56
      %s59 = sadd.s32 %s58, 1
      %p62 = scmp.eq.s32.totalorder %s17, 1
      %p63 = scmp.ne.s32.totalorder %s58, %s60
      %p64 = scmp.eq.s32.totalorder %s17, 0
      %p65 = por %p63, %p64
      %p66 = scmp.ne.s32.totalorder %s58, %s60
      %p67 = scmp.eq.s32.totalorder %s22, 1
      %p68 = por %p66, %p67
      %p69 = scmp.ne.s32.totalorder %s60, %s61
      %p70 = scmp.eq.s32.totalorder %s22, 0
      %p71 = por %p69, %p70
      %p72 = scmp.ne.s32.totalorder %s60, %s61
      %p73 = scmp.eq.s32.totalorder %s23, 1
      %p74 = por %p72, %p73
      %p76 = scmp.ne.s32.totalorder %s61, %s75
      %p77 = scmp.eq.s32.totalorder %s23, 0
      %p78 = por %p76, %p77
      %s79 = ssub.s32 %s24, %s36
      %s80 = ssub.s32 %s25, %s32
      %s81 = sor.u32 %s79, %s80
      %p82 = scmp.eq.s32.totalorder %s81, 0
      %s84 = sadd.s32 %s83, 1
      %s85 = scalar_select %p82, %s83, %s84
      %p88 = pneg %p82
      %p89 = scmp.eq.s32.totalorder %s17, 1
      %p90 = por %p88, %p89
      %p91 = scmp.ne.s32.totalorder %s83, %s86
      %p92 = scmp.eq.s32.totalorder %s17, 0
      %p93 = por %p91, %p92
      %p94 = scmp.ne.s32.totalorder %s83, %s86
      %p95 = scmp.eq.s32.totalorder %s22, 1
      %p96 = por %p94, %p95
      %p97 = scmp.ne.s32.totalorder %s86, %s87
      %p98 = scmp.eq.s32.totalorder %s22, 0
      %p99 = por %p97, %p98
      %p100 = scmp.ne.s32.totalorder %s86, %s87
      %p101 = scmp.eq.s32.totalorder %s23, 1
      %p102 = por %p100, %p101
      %p104 = scmp.ne.s32.totalorder %s87, %s103
      %p105 = scmp.eq.s32.totalorder %s23, 0
      %p106 = por %p104, %p105
      %s107 = ssub.s32 %s24, %s36
      %p108 = scmp.eq.s32.totalorder %s107, 0
      %s110 = sadd.s32 %s109, 1
      %s111 = scalar_select %p108, %s109, %s110
      %p114 = pneg %p108
      %p115 = scmp.eq.s32.totalorder %s17, 1
      %p116 = por %p114, %p115
      %p117 = scmp.ne.s32.totalorder %s109, %s112
      %p118 = scmp.eq.s32.totalorder %s17, 0
      %p119 = por %p117, %p118
      %p120 = scmp.ne.s32.totalorder %s109, %s112
      %p121 = scmp.eq.s32.totalorder %s22, 1
      %p122 = por %p120, %p121
      %p123 = scmp.ne.s32.totalorder %s112, %s113
      %p124 = scmp.eq.s32.totalorder %s22, 0
      %p125 = por %p123, %p124
      %p126 = scmp.ne.s32.totalorder %s112, %s113
      %p127 = scmp.eq.s32.totalorder %s23, 1
      %p128 = por %p126, %p127
      %p130 = scmp.ne.s32.totalorder %s113, %s129
      %p131 = scmp.eq.s32.totalorder %s23, 0
      %p132 = por %p130, %p131
      %p133 = scmp.le.s32.totalorder 1, %s17
      %p134 = scmp.lt.s32.totalorder %s17, 3
      %p135 = pnand %p133, %p134
      %p136 = pneg %p135
      // Predicated region
      $region9: #{tpu_custom_call.1} parent=5 // pred_check
        _
      $region10: #{tpu_custom_call.1} parent=5 // pred_check_branch
        %138 = sbr.rel (%p135) target = $region12
      $region11: #{tpu_custom_call.1} parent=5 // pred_region
        %s139 = ssub.s32 %s17, 1
        // Predicated region
        $region13: #{tpu_custom_call.1} parent=11 // pred_check
          %p140 = pneg %p50
        $region14: #{tpu_custom_call.1} parent=11 // pred_check_branch
          %142 = sbr.rel (%p140) target = $region16
        $region15: #{tpu_custom_call.1} parent=11 // pred_region
          %s144 = ssub.s32 16, 16
          %145 = vsyncadd [#allocation7], %s144
          %s147 = sshll.u32 %s0, 4
          %s148 = int_to_ptr.vmem [resolvable:$true] %s147
          %150 = dma.vmem_to_smem %s148, 16, [#allocation4], [#allocation7]
        $region16: #{tpu_custom_call.1} parent=11 // pred_fallthru
          _
        // Predicated region
        $region17: #{tpu_custom_call.1} parent=11 // pred_check
          %p151 = pneg %p71
        $region18: #{tpu_custom_call.1} parent=11 // pred_check_branch
          %153 = sbr.rel (%p151) target = $region20
        $region19: #{tpu_custom_call.1} parent=11 // pred_region
          _
        $region20: #{tpu_custom_call.1} parent=11 // pred_fallthru
          _
      $region12: #{tpu_custom_call.1} parent=5 // pred_fallthru
        _
      %p154 = scmp.lt.s32.totalorder %s17, 2
      // Predicated region
      $region21: #{tpu_custom_call.1} parent=5 // pred_check
        %p155 = pneg %p154
      $region22: #{tpu_custom_call.1} parent=5 // pred_check_branch
        %157 = sbr.rel (%p155) target = $region24
      $region23: #{tpu_custom_call.1} parent=5 // pred_region
        // Predicated region
        $region25: #{tpu_custom_call.1} parent=23 // pred_check
          %p158 = pneg %p93
        $region26: #{tpu_custom_call.1} parent=23 // pred_check_branch
          %160 = sbr.rel (%p158) target = $region28
        $region27: #{tpu_custom_call.1} parent=23 // pred_region
          %s161 = sand.u32 %s83, 1
          %s162 = scalar_lea.sflag [#allocation5], %s161
          %s163 = sand.u32 %s83, 1
          %s164 = smul.addr %s163, 8
          %s165 = scalar_lea.vmem [#allocation8], %s164
          %s167 = ssub.s32 128, 128
          %168 = vsyncadd %s162, %s167
          %s169 = smul.addr %s25, 2
          %s170 = smul.addr %s24, 2
          %s171 = sadd.s32 %s169, %s170
          %s172 = smul.addr %s171, 64
          %s173 = scalar_lea.hbm %s2, %s172
          %s175 = sshll.u32 %s165, 4
          %s176 = int_to_ptr.vmem [resolvable:$true] %s175
          %178 = dma.hbm_to_vmem [thread:$0]  %s173, 128, %s176, %s162
        $region28: #{tpu_custom_call.1} parent=23 // pred_fallthru
          _
      $region24: #{tpu_custom_call.1} parent=5 // pred_fallthru
        _
      %p179 = scmp.le.s32.totalorder 1, %s17
      %p180 = scmp.lt.s32.totalorder %s17, 3
      %p181 = pnand %p179, %p180
      %p182 = pneg %p181
      // Predicated region
      $region29: #{tpu_custom_call.1} parent=5 // pred_check
        _
      $region30: #{tpu_custom_call.1} parent=5 // pred_check_branch
        %184 = sbr.rel (%p181) target = $region32
      $region31: #{tpu_custom_call.1} parent=5 // pred_region
        %s185 = ssub.s32 %s17, 1
        // Predicated region
        $region33: #{tpu_custom_call.1} parent=31 // pred_check
          %p186 = pneg %p50
        $region34: #{tpu_custom_call.1} parent=31 // pred_check_branch
          %188 = sbr.rel (%p186) target = $region36
        $region35: #{tpu_custom_call.1} parent=31 // pred_region
          %189 = dma.done [#allocation7], 16
        $region36: #{tpu_custom_call.1} parent=31 // pred_fallthru
          _
        %s190 = sand.u32 %s86, 1
        %s191 = scalar_lea.sflag [#allocation5], %s190
        %s192 = sand.u32 %s86, 1
        %s193 = smul.addr %s192, 8
        %s194 = scalar_lea.vmem [#allocation8], %s193
        // Predicated region
        $region37: #{tpu_custom_call.1} parent=31 // pred_check
          %p195 = pneg %p99
        $region38: #{tpu_custom_call.1} parent=31 // pred_check_branch
          %197 = sbr.rel (%p195) target = $region40
        $region39: #{tpu_custom_call.1} parent=31 // pred_region
          %198 = dma.done %s191, 128
        $region40: #{tpu_custom_call.1} parent=31 // pred_fallthru
          _
        %199 = sfence
        %p200 = pneg %p50
        %p201 = pneg %p47
        %p202 = pneg %p71
        %p203 = pneg %p68
        %s204 = sand.u32 %s86, 1
        %s205 = scalar_lea.sflag [#allocation5], %s204
        %s206 = sand.u32 %s86, 1
        %s207 = smul.addr %s206, 8
        %s208 = scalar_lea.vmem [#allocation8], %s207
        %p209 = pneg %p99
        %p210 = pneg %p96
        %p211 = pneg %p125
        %p212 = pneg %p122
        %s213 = sand.u32 %s112, 1
        %s214 = scalar_lea.sflag [#allocation6], %s213
        %s215 = sand.u32 %s112, 1
        %s216 = smul.addr %s215, 2
        %s217 = scalar_lea.vmem [#allocation9], %s216
        %v218 = vld [vmem:[%s194] sm:$0xff]
        %v220 = vcombine.high %v218, %v218
        %vm222 = vcmask 1043456
        %v223 = vsel %vm222, %v218, -inf
        %v224 = vrot.slane %v223, 4
        %v225 = vmax.f32 %v223, %v224
        %v226 = vrot.slane %v225, 2
        %v227 = vmax.f32 %v225, %v226
        %v228 = vrot.slane %v227, 1
        %v229 = vmax.f32 %v227, %v228
        %v230 = vsel %vm222, %v220, -inf
        %v231 = vrot.slane %v230, 4
        %v232 = vmax.f32 %v230, %v231
        %v233 = vrot.slane %v232, 2
        %v234 = vmax.f32 %v232, %v233
        %v235 = vrot.slane %v234, 1
        %v236 = vmax.f32 %v234, %v235
        %v237 = vsel %vm222, %v218, 0.0
        %v238 = vrot.slane %v237, 4
        %v239 = vadd.f32 %v237, %v238
        %v240 = vrot.slane %v239, 2
        %v241 = vadd.f32 %v239, %v240
        %v242 = vrot.slane %v241, 1
        %v243 = vadd.f32 %v241, %v242
        %v244 = vsel %vm222, %v220, 0.0
        %v245 = vrot.slane %v244, 4
        %v246 = vadd.f32 %v244, %v245
        %v247 = vrot.slane %v246, 2
        %v248 = vadd.f32 %v246, %v247
        %v249 = vrot.slane %v248, 1
        %v250 = vadd.f32 %v248, %v249
        %p251 = scmp.eq.s32.totalorder %s27, 0
        // Predicated region
        $region41: #{tpu_custom_call.1} parent=31 // pred_check
          %p252 = pneg %p251
        $region42: #{tpu_custom_call.1} parent=31 // pred_check_branch
          %254 = sbr.rel (%p252) target = $region44
        $region43: #{tpu_custom_call.1} parent=31 // pred_region
          %255 = vst [vmem:[#allocation2] sm:$0xff] 0.0
          %v258 = vcombine.low %v229, %v236
          %v260 = vunpack.c.l.s4 1966171168
          %v261 = vunpack.c.0.s8 %v260
          %v262 = vlaneseq
          %v263 = vshrl.u32 %v262, 7
          %v264 = vsub.s32 %v261, %v263
          %v265 = vrot.slane %v258, %v264
          %v267 = vunpack.c.l.s4 1966171168
          %v268 = vunpack.c.0.s8 %v267
          %v269 = vlaneseq
          %v270 = vshrl.u32 %v269, 7
          %v271 = vsub.s32 %v268, %v270
          %v272 = vrot.slane %v265, %v271
          %v274 = vlaneseq
          %vm275 = vcmp.ge.s32.totalorder %v274, 0
          %vm276 = vcmp.lt.s32.totalorder %v274, 256
          %vm277 = vmand %vm275, %vm276
          %s278 = scalar_lea.vmem [#allocation2], 2
          %279 = vst.msk [vmem:[%s278] ss:$2 sm:$0x3] %vm277, %v272
          %v282 = vcombine.low %v243, %v250
          %v284 = vunpack.c.l.s4 1966171168
          %v285 = vunpack.c.0.s8 %v284
          %v286 = vlaneseq
          %v287 = vshrl.u32 %v286, 7
          %v288 = vsub.s32 %v285, %v287
          %v289 = vrot.slane %v282, %v288
          %v291 = vunpack.c.l.s4 1966171168
          %v292 = vunpack.c.0.s8 %v291
          %v293 = vlaneseq
          %v294 = vshrl.u32 %v293, 7
          %v295 = vsub.s32 %v292, %v294
          %v296 = vrot.slane %v289, %v295
          %s298 = scalar_lea.vmem [#allocation2], 3
          %299 = vst.msk [vmem:[%s298] ss:$2 sm:$0x3] %vm277, %v296
        $region44: #{tpu_custom_call.1} parent=31 // pred_fallthru
          _
        %p300 = scmp.ne.s32.totalorder %s27, 0
        // Predicated region
        $region45: #{tpu_custom_call.1} parent=31 // pred_check
          %p301 = pneg %p300
        $region46: #{tpu_custom_call.1} parent=31 // pred_check_branch
          %303 = sbr.rel (%p301) target = $region48
        $region47: #{tpu_custom_call.1} parent=31 // pred_region
          %s304 = scalar_lea.vmem [#allocation2], 2
          %v305 = vld [vmem:[%s304] ss:$2 sm:$0x3]
          %v308 = vcombine.low %v229, %v236
          %v310 = vunpack.c.l.s4 1966171168
          %v311 = vunpack.c.0.s8 %v310
          %v312 = vlaneseq
          %v313 = vshrl.u32 %v312, 7
          %v314 = vsub.s32 %v311, %v313
          %v315 = vrot.slane %v308, %v314
          %v317 = vunpack.c.l.s4 1966171168
          %v318 = vunpack.c.0.s8 %v317
          %v319 = vlaneseq
          %v320 = vshrl.u32 %v319, 7
          %v321 = vsub.s32 %v318, %v320
          %v322 = vrot.slane %v315, %v321
          %v324 = vmax.f32 %v305, %v322
          %v325 = vlaneseq
          %vm326 = vcmp.ge.s32.totalorder %v325, 0
          %vm327 = vcmp.lt.s32.totalorder %v325, 256
          %vm328 = vmand %vm326, %vm327
          %329 = vst.msk [vmem:[%s304] ss:$2 sm:$0x3] %vm328, %v324
          %s330 = scalar_lea.vmem [#allocation2], 3
          %v331 = vld [vmem:[%s330] ss:$2 sm:$0x3]
          %v334 = vcombine.low %v243, %v250
          %v336 = vunpack.c.l.s4 1966171168
          %v337 = vunpack.c.0.s8 %v336
          %v338 = vlaneseq
          %v339 = vshrl.u32 %v338, 7
          %v340 = vsub.s32 %v337, %v339
          %v341 = vrot.slane %v334, %v340
          %v343 = vunpack.c.l.s4 1966171168
          %v344 = vunpack.c.0.s8 %v343
          %v345 = vlaneseq
          %v346 = vshrl.u32 %v345, 7
          %v347 = vsub.s32 %v344, %v346
          %v348 = vrot.slane %v341, %v347
          %v350 = vadd.f32 %v331, %v348
          %351 = vst.msk [vmem:[%s330] ss:$2 sm:$0x3] %vm328, %v350
        $region48: #{tpu_custom_call.1} parent=31 // pred_fallthru
          _
        // Predicated region
        $region49: #{tpu_custom_call.1} parent=31 // pred_check
          %p352 = pneg %p251
        $region50: #{tpu_custom_call.1} parent=31 // pred_check_branch
          %354 = sbr.rel (%p352) target = $region52
        $region51: #{tpu_custom_call.1} parent=31 // pred_region
          %s355 = sld [smem:[#allocation4]]
          %s356 = sld [smem:[#allocation4 + $0x1]]
          %s357 = sld [smem:[#allocation4 + $0x2]]
          %s358 = sld [smem:[#allocation4 + $0x3]]
          %s359 = sld [smem:[#allocation4 + $0x4]]
          %s360 = sld [smem:[#allocation4 + $0x5]]
          %s361 = sld [smem:[#allocation4 + $0x6]]
          %s362 = sld [smem:[#allocation4 + $0x7]]
          %s363 = sld [smem:[#allocation4 + $0x8]]
          %s364 = sld [smem:[#allocation4 + $0x9]]
          %s365 = sld [smem:[#allocation4 + $0xa]]
          %s366 = sld [smem:[#allocation4 + $0xb]]
          %s367 = sld [smem:[#allocation4 + $0xc]]
          %s368 = sld [smem:[#allocation4 + $0xd]]
          %s369 = sld [smem:[#allocation4 + $0xe]]
          %s370 = sld [smem:[#allocation4 + $0xf]]
          %s371 = sld [smem:[#allocation4 + $0x10]]
          %s372 = sld [smem:[#allocation4 + $0x11]]
          %s373 = sld [smem:[#allocation4 + $0x12]]
          %s374 = sld [smem:[#allocation4 + $0x13]]
          %s375 = sld [smem:[#allocation4 + $0x14]]
          %s376 = sld [smem:[#allocation4 + $0x15]]
          %s377 = sld [smem:[#allocation4 + $0x16]]
          %s378 = sld [smem:[#allocation4 + $0x17]]
          %s379 = sld [smem:[#allocation4 + $0x18]]
          %s380 = sld [smem:[#allocation4 + $0x19]]
          %s381 = sld [smem:[#allocation4 + $0x1a]]
          %s382 = sld [smem:[#allocation4 + $0x1b]]
          %s383 = sld [smem:[#allocation4 + $0x1c]]
          %s384 = sld [smem:[#allocation4 + $0x1d]]
          %s385 = sld [smem:[#allocation4 + $0x1e]]
          %s386 = sld [smem:[#allocation4 + $0x1f]]
          %s387 = sld [smem:[#allocation4 + $0x20]]
          %s388 = sld [smem:[#allocation4 + $0x21]]
          %s389 = sld [smem:[#allocation4 + $0x22]]
          %s390 = sld [smem:[#allocation4 + $0x23]]
          %s391 = sld [smem:[#allocation4 + $0x24]]
          %s392 = sld [smem:[#allocation4 + $0x25]]
          %s393 = sld [smem:[#allocation4 + $0x26]]
          %s394 = sld [smem:[#allocation4 + $0x27]]
          %s395 = sld [smem:[#allocation4 + $0x28]]
          %s396 = sld [smem:[#allocation4 + $0x29]]
          %s397 = sld [smem:[#allocation4 + $0x2a]]
          %s398 = sld [smem:[#allocation4 + $0x2b]]
          %s399 = sld [smem:[#allocation4 + $0x2c]]
          %s400 = sld [smem:[#allocation4 + $0x2d]]
          %s401 = sld [smem:[#allocation4 + $0x2e]]
          %s402 = sld [smem:[#allocation4 + $0x2f]]
          %s403 = sld [smem:[#allocation4 + $0x30]]
          %s404 = sld [smem:[#allocation4 + $0x31]]
          %s405 = sld [smem:[#allocation4 + $0x32]]
          %s406 = sld [smem:[#allocation4 + $0x33]]
          %s407 = sld [smem:[#allocation4 + $0x34]]
          %s408 = sld [smem:[#allocation4 + $0x35]]
          %s409 = sld [smem:[#allocation4 + $0x36]]
          %s410 = sld [smem:[#allocation4 + $0x37]]
          %s411 = sld [smem:[#allocation4 + $0x38]]
          %s412 = sld [smem:[#allocation4 + $0x39]]
          %s413 = sld [smem:[#allocation4 + $0x3a]]
          %s414 = sld [smem:[#allocation4 + $0x3b]]
          %s415 = sld [smem:[#allocation4 + $0x3c]]
          %s416 = sld [smem:[#allocation4 + $0x3d]]
          %s417 = sld [smem:[#allocation4 + $0x3e]]
          %s418 = sld [smem:[#allocation4 + $0x3f]]
          %s419 = sld [smem:[#allocation4 + $0x40]]
          %s420 = sld [smem:[#allocation4 + $0x41]]
          %s421 = sld [smem:[#allocation4 + $0x42]]
          %s422 = sld [smem:[#allocation4 + $0x43]]
          %s423 = sld [smem:[#allocation4 + $0x44]]
          %s424 = sld [smem:[#allocation4 + $0x45]]
          %s425 = sld [smem:[#allocation4 + $0x46]]
          %s426 = sld [smem:[#allocation4 + $0x47]]
          %s427 = sld [smem:[#allocation4 + $0x48]]
          %s428 = sld [smem:[#allocation4 + $0x49]]
          %s429 = sld [smem:[#allocation4 + $0x4a]]
          %s430 = sld [smem:[#allocation4 + $0x4b]]
          %s431 = sld [smem:[#allocation4 + $0x4c]]
          %s432 = sld [smem:[#allocation4 + $0x4d]]
          %s433 = sld [smem:[#allocation4 + $0x4e]]
          %s434 = sld [smem:[#allocation4 + $0x4f]]
          %s435 = sld [smem:[#allocation4 + $0x50]]
          %s436 = sld [smem:[#allocation4 + $0x51]]
          %s437 = sld [smem:[#allocation4 + $0x52]]
          %s438 = sld [smem:[#allocation4 + $0x53]]
          %s439 = sld [smem:[#allocation4 + $0x54]]
          %s440 = sld [smem:[#allocation4 + $0x55]]
          %s441 = sld [smem:[#allocation4 + $0x56]]
          %s442 = sld [smem:[#allocation4 + $0x57]]
          %s443 = sld [smem:[#allocation4 + $0x58]]
          %s444 = sld [smem:[#allocation4 + $0x59]]
          %s445 = sld [smem:[#allocation4 + $0x5a]]
          %s446 = sld [smem:[#allocation4 + $0x5b]]
          %s447 = sld [smem:[#allocation4 + $0x5c]]
          %s448 = sld [smem:[#allocation4 + $0x5d]]
          %s449 = sld [smem:[#allocation4 + $0x5e]]
          %s450 = sld [smem:[#allocation4 + $0x5f]]
          %s451 = sld [smem:[#allocation4 + $0x60]]
          %s452 = sld [smem:[#allocation4 + $0x61]]
          %s453 = sld [smem:[#allocation3]]
          %v454 = vlaneseq
          %v455 = vand.u32 %v454, 127
          %v456 = vadd.s32 %v455, 128
          %vm457 = vcmp.lt.s32.totalorder %v455, 0
          %v458 = vsub.s32 0, %v455
          %v459 = vsel %vm457, %v458, %v455
          %v460 = vshrl.u32 %v459, 4
          %v461 = vand.u32 %v459, 15
          %v462 = vsub.s32 0, %v461
          %v463 = vsel %vm457, %v462, %v461
          %vm464 = vcmp.lt.s32.totalorder %v456, 0
          %v465 = vsub.s32 0, %v456
          %v466 = vsel %vm464, %v465, %v456
          %v467 = vshrl.u32 %v466, 4
          %v468 = vand.u32 %v466, 15
          %v469 = vsub.s32 0, %v468
          %v470 = vsel %vm464, %v469, %v468
          %vm471 = vcmp.ne.s32.totalorder %v463, 0
          %vm472 = vcmp.ne.s32.totalorder %v470, 0
          %vm473 = vcmp.lt.s32.totalorder %v463, 0
          %vm474 = vcmp.lt.s32.totalorder %v470, 0
          %vm475 = vmand %vm473, %vm471
          %vm476 = vmand %vm474, %vm472
          %v477 = vadd.s32 %v463, 16
          %v478 = vadd.s32 %v470, 16
          %v479 = vsel %vm475, %v477, %v463
          %v480 = vsel %vm476, %v478, %v470
          %v481 = vstv %s453
          %v482 = vadd.s32 %v479, 4294967293
          %v483 = vadd.s32 %v480, 4294967293
          %vm484 = vcmp.ge.s32.totalorder %v482, 0
          %vm485 = vcmp.ge.s32.totalorder %v483, 0
          %vm486 = vcmp.lt.s32.totalorder %v482, 16
          %vm487 = vcmp.lt.s32.totalorder %v483, 16
          %vm488 = vmand %vm484, %vm486
          %vm489 = vmand %vm485, %vm487
          %v490 = vsel %vm488, 1, 0
          %v491 = vsel %vm489, 1, 0
          %v492 = vcvt.s32.f32 %v490
          %v493 = vcvt.s32.f32 %v491
          %v494 = vld [vmem:[#allocation2] ss:$2 sm:$0x7]
          %v495 = vstv %s355
          %v496 = vmul.f32 %v495, %v494
          %v497 = vadd.f32 %v496, 0.0
          %v498 = vstv %s362
          %v499 = vmul.f32 %v498, %v494
          %501 = vrot.lane.b32.xlu0 %v499, 112
          %v502 = vpop.permute.xlu0 %501
          %v503 = vrot.slane %v502, 1
          %vm504 = vcmask 916480
          %v505 = vsel %vm504, %v502, %v503
          %v507 = vadd.f32 %v497, %v505
          %v508 = vstv %s369
          %v509 = vmul.f32 %v508, %v494
          %511 = vrot.lane.b32.xlu0 %v509, 96
          %v512 = vpop.permute.xlu0 %511
          %v513 = vrot.slane %v512, 1
          %vm514 = vcmask 785408
          %v515 = vsel %vm514, %v512, %v513
          %v517 = vadd.f32 %v507, %v515
          %v518 = vstv %s376
          %v519 = vmul.f32 %v518, %v494
          %521 = vrot.lane.b32.xlu0 %v519, 80
          %v522 = vpop.permute.xlu0 %521
          %v523 = vrot.slane %v522, 1
          %vm524 = vcmask 654336
          %v525 = vsel %vm524, %v522, %v523
          %v527 = vadd.f32 %v517, %v525
          %s528 = scalar_lea.vmem [#allocation2], 2
          %v529 = vld [vmem:[%s528] ss:$2 sm:$0x7]
          %v530 = vstv %s383
          %v531 = vmul.f32 %v530, %v529
          %533 = vrot.lane.b32.xlu0 %v531, 64
          %v534 = vpop.permute.xlu0 %533
          %v535 = vrot.slane %v534, 7
          %vm536 = vcmask 523264
          %v537 = vsel %vm536, %v535, %v534
          %v539 = vadd.f32 %v527, %v537
          %v540 = vstv %s390
          %v541 = vmul.f32 %v540, %v529
          %543 = vrot.lane.b32.xlu0 %v541, 48
          %v544 = vpop.permute.xlu0 %543
          %v545 = vrot.slane %v544, 7
          %vm546 = vcmask 392192
          %v547 = vsel %vm546, %v545, %v544
          %v549 = vadd.f32 %v539, %v547
          %v550 = vstv %s397
          %v551 = vmul.f32 %v550, %v529
          %553 = vrot.lane.b32.xlu0 %v551, 32
          %v554 = vpop.permute.xlu0 %553
          %v555 = vrot.slane %v554, 7
          %vm556 = vcmask 261120
          %v557 = vsel %vm556, %v555, %v554
          %v559 = vadd.f32 %v549, %v557
          %v560 = vadd.f32 %v559, 0.0
          %s561 = scalar_lea.vmem [#allocation2], 1
          %v562 = vld [vmem:[%s561] ss:$2 sm:$0x7]
          %v563 = vstv %s404
          %v564 = vmul.f32 %v563, %v562
          %v565 = vadd.f32 %v564, 0.0
          %v566 = vstv %s411
          %v567 = vmul.f32 %v566, %v562
          %569 = vrot.lane.b32.xlu0 %v567, 112
          %v570 = vpop.permute.xlu0 %569
          %v571 = vrot.slane %v570, 1
          %v572 = vsel %vm504, %v570, %v571
          %v574 = vadd.f32 %v565, %v572
          %v575 = vstv %s418
          %v576 = vmul.f32 %v575, %v562
          %578 = vrot.lane.b32.xlu0 %v576, 96
          %v579 = vpop.permute.xlu0 %578
          %v580 = vrot.slane %v579, 1
          %v581 = vsel %vm514, %v579, %v580
          %v583 = vadd.f32 %v574, %v581
          %v584 = vstv %s425
          %v585 = vmul.f32 %v584, %v562
          %587 = vrot.lane.b32.xlu0 %v585, 80
          %v588 = vpop.permute.xlu0 %587
          %v589 = vrot.slane %v588, 1
          %v590 = vsel %vm524, %v588, %v589
          %v592 = vadd.f32 %v583, %v590
          %s593 = scalar_lea.vmem [#allocation2], 3
          %v594 = vld [vmem:[%s593] ss:$2 sm:$0x7]
          %v595 = vstv %s432
          %v596 = vmul.f32 %v595, %v594
          %598 = vrot.lane.b32.xlu0 %v596, 64
          %v599 = vpop.permute.xlu0 %598
          %v600 = vrot.slane %v599, 7
          %v601 = vsel %vm536, %v600, %v599
          %v603 = vadd.f32 %v592, %v601
          %v604 = vstv %s439
          %v605 = vmul.f32 %v604, %v594
          %607 = vrot.lane.b32.xlu0 %v605, 48
          %v608 = vpop.permute.xlu0 %607
          %v609 = vrot.slane %v608, 7
          %v610 = vsel %vm546, %v609, %v608
          %v612 = vadd.f32 %v603, %v610
          %v613 = vstv %s446
          %v614 = vmul.f32 %v613, %v594
          %616 = vrot.lane.b32.xlu0 %v614, 32
          %v617 = vpop.permute.xlu0 %616
          %v618 = vrot.slane %v617, 7
          %v619 = vsel %vm556, %v618, %v617
          %v621 = vadd.f32 %v612, %v619
          %v622 = vadd.f32 %v560, %v621
          %v624 = vlaneseq
          %v625 = vshrl.u32 %v624, 7
          %v626 = vsub.s32 0, %v625
          %v627 = vrot.slane %v622, %v626
          %v628 = vlaneseq
          %v629 = vshrl.u32 %v628, 7
          %v630 = vsub.s32 1, %v629
          %v631 = vrot.slane %v622, %v630
          %v632 = vlaneseq
          %v633 = vshrl.u32 %v632, 7
          %v634 = vsub.s32 2, %v633
          %v635 = vrot.slane %v622, %v634
          %636 = vrot.lane.b32.xlu0 %v627, 51
          %v637 = vpop.permute.xlu0 %636
          %638 = vrot.lane.b32.xlu0 %v631, 51
          %v639 = vpop.permute.xlu0 %638
          %640 = vrot.lane.b32.xlu0 %v635, 51
          %v641 = vpop.permute.xlu0 %640
          %vm642 = vcmask 416768
          %v643 = vsel %vm642, %v637, %v639
          %v644 = vsel %vm642, %v639, %v641
          %v647 = vmul.f32 %v492, %v643
          %v648 = vmul.f32 %v493, %v644
          %v649 = vadd.f32 %v481, %v647
          %v650 = vadd.f32 %v481, %v648
          %v651 = vadd.s32 %v479, 4294967294
          %v652 = vadd.s32 %v480, 4294967294
          %vm653 = vcmp.ge.s32.totalorder %v651, 0
          %vm654 = vcmp.ge.s32.totalorder %v652, 0
          %vm655 = vcmp.lt.s32.totalorder %v651, 16
          %vm656 = vcmp.lt.s32.totalorder %v652, 16
          %vm657 = vmand %vm653, %vm655
          %vm658 = vmand %vm654, %vm656
          %v659 = vsel %vm657, 1, 0
          %v660 = vsel %vm658, 1, 0
          %v661 = vcvt.s32.f32 %v659
          %v662 = vcvt.s32.f32 %v660
          %v663 = vstv %s356
          %v664 = vmul.f32 %v663, %v494
          %v665 = vadd.f32 %v664, 0.0
          %v666 = vstv %s363
          %v667 = vmul.f32 %v666, %v494
          %669 = vrot.lane.b32.xlu0 %v667, 112
          %v670 = vpop.permute.xlu0 %669
          %v671 = vrot.slane %v670, 1
          %v672 = vsel %vm504, %v670, %v671
          %v674 = vadd.f32 %v665, %v672
          %v675 = vstv %s370
          %v676 = vmul.f32 %v675, %v494
          %678 = vrot.lane.b32.xlu0 %v676, 96
          %v679 = vpop.permute.xlu0 %678
          %v680 = vrot.slane %v679, 1
          %v681 = vsel %vm514, %v679, %v680
          %v683 = vadd.f32 %v674, %v681
          %v684 = vstv %s377
          %v685 = vmul.f32 %v684, %v494
          %687 = vrot.lane.b32.xlu0 %v685, 80
          %v688 = vpop.permute.xlu0 %687
          %v689 = vrot.slane %v688, 1
          %v690 = vsel %vm524, %v688, %v689
          %v692 = vadd.f32 %v683, %v690
          %v693 = vstv %s384
          %v694 = vmul.f32 %v693, %v529
          %696 = vrot.lane.b32.xlu0 %v694, 64
          %v697 = vpop.permute.xlu0 %696
          %v698 = vrot.slane %v697, 7
          %v699 = vsel %vm536, %v698, %v697
          %v701 = vadd.f32 %v692, %v699
          %v702 = vstv %s391
          %v703 = vmul.f32 %v702, %v529
          %705 = vrot.lane.b32.xlu0 %v703, 48
          %v706 = vpop.permute.xlu0 %705
          %v707 = vrot.slane %v706, 7
          %v708 = vsel %vm546, %v707, %v706
          %v710 = vadd.f32 %v701, %v708
          %v711 = vstv %s398
          %v712 = vmul.f32 %v711, %v529
          %714 = vrot.lane.b32.xlu0 %v712, 32
          %v715 = vpop.permute.xlu0 %714
          %v716 = vrot.slane %v715, 7
          %v717 = vsel %vm556, %v716, %v715
          %v719 = vadd.f32 %v710, %v717
          %v720 = vadd.f32 %v719, 0.0
          %v721 = vstv %s405
          %v722 = vmul.f32 %v721, %v562
          %v723 = vadd.f32 %v722, 0.0
          %v724 = vstv %s412
          %v725 = vmul.f32 %v724, %v562
          %727 = vrot.lane.b32.xlu0 %v725, 112
          %v728 = vpop.permute.xlu0 %727
          %v729 = vrot.slane %v728, 1
          %v730 = vsel %vm504, %v728, %v729
          %v732 = vadd.f32 %v723, %v730
          %v733 = vstv %s419
          %v734 = vmul.f32 %v733, %v562
          %736 = vrot.lane.b32.xlu0 %v734, 96
          %v737 = vpop.permute.xlu0 %736
          %v738 = vrot.slane %v737, 1
          %v739 = vsel %vm514, %v737, %v738
          %v741 = vadd.f32 %v732, %v739
          %v742 = vstv %s426
          %v743 = vmul.f32 %v742, %v562
          %745 = vrot.lane.b32.xlu0 %v743, 80
          %v746 = vpop.permute.xlu0 %745
          %v747 = vrot.slane %v746, 1
          %v748 = vsel %vm524, %v746, %v747
          %v750 = vadd.f32 %v741, %v748
          %v751 = vstv %s433
          %v752 = vmul.f32 %v751, %v594
          %754 = vrot.lane.b32.xlu0 %v752, 64
          %v755 = vpop.permute.xlu0 %754
          %v756 = vrot.slane %v755, 7
          %v757 = vsel %vm536, %v756, %v755
          %v759 = vadd.f32 %v750, %v757
          %v760 = vstv %s440
          %v761 = vmul.f32 %v760, %v594
          %763 = vrot.lane.b32.xlu0 %v761, 48
          %v764 = vpop.permute.xlu0 %763
          %v765 = vrot.slane %v764, 7
          %v766 = vsel %vm546, %v765, %v764
          %v768 = vadd.f32 %v759, %v766
          %v769 = vstv %s447
          %v770 = vmul.f32 %v769, %v594
          %772 = vrot.lane.b32.xlu0 %v770, 32
          %v773 = vpop.permute.xlu0 %772
          %v774 = vrot.slane %v773, 7
          %v775 = vsel %vm556, %v774, %v773
          %v777 = vadd.f32 %v768, %v775
          %v778 = vadd.f32 %v720, %v777
          %v780 = vlaneseq
          %v781 = vshrl.u32 %v780, 7
          %v782 = vsub.s32 0, %v781
          %v783 = vrot.slane %v778, %v782
          %v784 = vlaneseq
          %v785 = vshrl.u32 %v784, 7
          %v786 = vsub.s32 1, %v785
          %v787 = vrot.slane %v778, %v786
          %v788 = vlaneseq
          %v789 = vshrl.u32 %v788, 7
          %v790 = vsub.s32 2, %v789
          %v791 = vrot.slane %v778, %v790
          %792 = vrot.lane.b32.xlu0 %v783, 50
          %v793 = vpop.permute.xlu0 %792
          %794 = vrot.lane.b32.xlu0 %v787, 50
          %v795 = vpop.permute.xlu0 %794
          %796 = vrot.lane.b32.xlu0 %v791, 50
          %v797 = vpop.permute.xlu0 %796
          %vm798 = vcmask 408576
          %v799 = vsel %vm798, %v793, %v795
          %v800 = vsel %vm798, %v795, %v797
          %v803 = vmul.f32 %v661, %v799
          %v804 = vmul.f32 %v662, %v800
          %v805 = vadd.f32 %v649, %v803
          %v806 = vadd.f32 %v650, %v804
          %v807 = vadd.s32 %v479, 4294967295
          %v808 = vadd.s32 %v480, 4294967295
          %vm809 = vcmp.ge.s32.totalorder %v807, 0
          %vm810 = vcmp.ge.s32.totalorder %v808, 0
          %vm811 = vcmp.lt.s32.totalorder %v807, 16
          %vm812 = vcmp.lt.s32.totalorder %v808, 16
          %vm813 = vmand %vm809, %vm811
          %vm814 = vmand %vm810, %vm812
          %v815 = vsel %vm813, 1, 0
          %v816 = vsel %vm814, 1, 0
          %v817 = vcvt.s32.f32 %v815
          %v818 = vcvt.s32.f32 %v816
          %v819 = vstv %s357
          %v820 = vmul.f32 %v819, %v494
          %v821 = vadd.f32 %v820, 0.0
          %v822 = vstv %s364
          %v823 = vmul.f32 %v822, %v494
          %825 = vrot.lane.b32.xlu0 %v823, 112
          %v826 = vpop.permute.xlu0 %825
          %v827 = vrot.slane %v826, 1
          %v828 = vsel %vm504, %v826, %v827
          %v830 = vadd.f32 %v821, %v828
          %v831 = vstv %s371
          %v832 = vmul.f32 %v831, %v494
          %834 = vrot.lane.b32.xlu0 %v832, 96
          %v835 = vpop.permute.xlu0 %834
          %v836 = vrot.slane %v835, 1
          %v837 = vsel %vm514, %v835, %v836
          %v839 = vadd.f32 %v830, %v837
          %v840 = vstv %s378
          %v841 = vmul.f32 %v840, %v494
          %843 = vrot.lane.b32.xlu0 %v841, 80
          %v844 = vpop.permute.xlu0 %843
          %v845 = vrot.slane %v844, 1
          %v846 = vsel %vm524, %v844, %v845
          %v848 = vadd.f32 %v839, %v846
          %v849 = vstv %s385
          %v850 = vmul.f32 %v849, %v529
          %852 = vrot.lane.b32.xlu0 %v850, 64
          %v853 = vpop.permute.xlu0 %852
          %v854 = vrot.slane %v853, 7
          %v855 = vsel %vm536, %v854, %v853
          %v857 = vadd.f32 %v848, %v855
          %v858 = vstv %s392
          %v859 = vmul.f32 %v858, %v529
          %861 = vrot.lane.b32.xlu0 %v859, 48
          %v862 = vpop.permute.xlu0 %861
          %v863 = vrot.slane %v862, 7
          %v864 = vsel %vm546, %v863, %v862
          %v866 = vadd.f32 %v857, %v864
          %v867 = vstv %s399
          %v868 = vmul.f32 %v867, %v529
          %870 = vrot.lane.b32.xlu0 %v868, 32
          %v871 = vpop.permute.xlu0 %870
          %v872 = vrot.slane %v871, 7
          %v873 = vsel %vm556, %v872, %v871
          %v875 = vadd.f32 %v866, %v873
          %v876 = vadd.f32 %v875, 0.0
          %v877 = vstv %s406
          %v878 = vmul.f32 %v877, %v562
          %v879 = vadd.f32 %v878, 0.0
          %v880 = vstv %s413
          %v881 = vmul.f32 %v880, %v562
          %883 = vrot.lane.b32.xlu0 %v881, 112
          %v884 = vpop.permute.xlu0 %883
          %v885 = vrot.slane %v884, 1
          %v886 = vsel %vm504, %v884, %v885
          %v888 = vadd.f32 %v879, %v886
          %v889 = vstv %s420
          %v890 = vmul.f32 %v889, %v562
          %892 = vrot.lane.b32.xlu0 %v890, 96
          %v893 = vpop.permute.xlu0 %892
          %v894 = vrot.slane %v893, 1
          %v895 = vsel %vm514, %v893, %v894
          %v897 = vadd.f32 %v888, %v895
          %v898 = vstv %s427
          %v899 = vmul.f32 %v898, %v562
          %901 = vrot.lane.b32.xlu0 %v899, 80
          %v902 = vpop.permute.xlu0 %901
          %v903 = vrot.slane %v902, 1
          %v904 = vsel %vm524, %v902, %v903
          %v906 = vadd.f32 %v897, %v904
          %v907 = vstv %s434
          %v908 = vmul.f32 %v907, %v594
          %910 = vrot.lane.b32.xlu0 %v908, 64
          %v911 = vpop.permute.xlu0 %910
          %v912 = vrot.slane %v911, 7
          %v913 = vsel %vm536, %v912, %v911
          %v915 = vadd.f32 %v906, %v913
          %v916 = vstv %s441
          %v917 = vmul.f32 %v916, %v594
          %919 = vrot.lane.b32.xlu0 %v917, 48
          %v920 = vpop.permute.xlu0 %919
          %v921 = vrot.slane %v920, 7
          %v922 = vsel %vm546, %v921, %v920
          %v924 = vadd.f32 %v915, %v922
          %v925 = vstv %s448
          %v926 = vmul.f32 %v925, %v594
          %928 = vrot.lane.b32.xlu0 %v926, 32
          %v929 = vpop.permute.xlu0 %928
          %v930 = vrot.slane %v929, 7
          %v931 = vsel %vm556, %v930, %v929
          %v933 = vadd.f32 %v924, %v931
          %v934 = vadd.f32 %v876, %v933
          %v936 = vlaneseq
          %v937 = vshrl.u32 %v936, 7
          %v938 = vsub.s32 0, %v937
          %v939 = vrot.slane %v934, %v938
          %v940 = vlaneseq
          %v941 = vshrl.u32 %v940, 7
          %v942 = vsub.s32 1, %v941
          %v943 = vrot.slane %v934, %v942
          %v944 = vlaneseq
          %v945 = vshrl.u32 %v944, 7
          %v946 = vsub.s32 2, %v945
          %v947 = vrot.slane %v934, %v946
          %948 = vrot.lane.b32.xlu0 %v939, 49
          %v949 = vpop.permute.xlu0 %948
          %950 = vrot.lane.b32.xlu0 %v943, 49
          %v951 = vpop.permute.xlu0 %950
          %952 = vrot.lane.b32.xlu0 %v947, 49
          %v953 = vpop.permute.xlu0 %952
          %vm954 = vcmask 400384
          %v955 = vsel %vm954, %v949, %v951
          %v956 = vsel %vm954, %v951, %v953
          %v959 = vmul.f32 %v817, %v955
          %v960 = vmul.f32 %v818, %v956
          %v961 = vadd.f32 %v805, %v959
          %v962 = vadd.f32 %v806, %v960
          %vm963 = vcmp.ge.s32.totalorder %v479, 0
          %vm964 = vcmp.ge.s32.totalorder %v480, 0
          %vm965 = vcmp.lt.s32.totalorder %v479, 16
          %vm966 = vcmp.lt.s32.totalorder %v480, 16
          %vm967 = vmand %vm963, %vm965
          %vm968 = vmand %vm964, %vm966
          %v969 = vsel %vm967, 1, 0
          %v970 = vsel %vm968, 1, 0
          %v971 = vcvt.s32.f32 %v969
          %v972 = vcvt.s32.f32 %v970
          %v973 = vstv %s358
          %v974 = vmul.f32 %v973, %v494
          %v975 = vadd.f32 %v974, 0.0
          %v976 = vstv %s365
          %v977 = vmul.f32 %v976, %v494
          %979 = vrot.lane.b32.xlu0 %v977, 112
          %v980 = vpop.permute.xlu0 %979
          %v981 = vrot.slane %v980, 1
          %v982 = vsel %vm504, %v980, %v981
          %v984 = vadd.f32 %v975, %v982
          %v985 = vstv %s372
          %v986 = vmul.f32 %v985, %v494
          %988 = vrot.lane.b32.xlu0 %v986, 96
          %v989 = vpop.permute.xlu0 %988
          %v990 = vrot.slane %v989, 1
          %v991 = vsel %vm514, %v989, %v990
          %v993 = vadd.f32 %v984, %v991
          %s994 = scalar_lea.vmem [#allocation2], 2
          %v995 = vld [vmem:[%s994] ss:$2 sm:$0x3]
          %v996 = vstv %s379
          %v997 = vmul.f32 %v996, %v995
          %999 = vrot.lane.b32.xlu0 %v997, 80
          %v1000 = vpop.permute.xlu0 %999
          %v1001 = vrot.slane %v1000, 7
          %v1002 = vsel %vm524, %v1001, %v1000
          %v1004 = vadd.f32 %v993, %v1002
          %v1005 = vstv %s386
          %v1006 = vmul.f32 %v1005, %v529
          %1008 = vrot.lane.b32.xlu0 %v1006, 64
          %v1009 = vpop.permute.xlu0 %1008
          %v1010 = vrot.slane %v1009, 7
          %v1011 = vsel %vm536, %v1010, %v1009
          %v1013 = vadd.f32 %v1004, %v1011
          %v1014 = vstv %s393
          %v1015 = vmul.f32 %v1014, %v529
          %1017 = vrot.lane.b32.xlu0 %v1015, 48
          %v1018 = vpop.permute.xlu0 %1017
          %v1019 = vrot.slane %v1018, 7
          %v1020 = vsel %vm546, %v1019, %v1018
          %v1022 = vadd.f32 %v1013, %v1020
          %v1023 = vstv %s400
          %v1024 = vmul.f32 %v1023, %v529
          %1026 = vrot.lane.b32.xlu0 %v1024, 32
          %v1027 = vpop.permute.xlu0 %1026
          %v1028 = vrot.slane %v1027, 7
          %v1029 = vsel %vm556, %v1028, %v1027
          %v1031 = vadd.f32 %v1022, %v1029
          %v1032 = vadd.f32 %v1031, 0.0
          %v1033 = vstv %s407
          %v1034 = vmul.f32 %v1033, %v562
          %v1035 = vadd.f32 %v1034, 0.0
          %v1036 = vstv %s414
          %v1037 = vmul.f32 %v1036, %v562
          %1039 = vrot.lane.b32.xlu0 %v1037, 112
          %v1040 = vpop.permute.xlu0 %1039
          %v1041 = vrot.slane %v1040, 1
          %v1042 = vsel %vm504, %v1040, %v1041
          %v1044 = vadd.f32 %v1035, %v1042
          %v1045 = vstv %s421
          %v1046 = vmul.f32 %v1045, %v562
          %1048 = vrot.lane.b32.xlu0 %v1046, 96
          %v1049 = vpop.permute.xlu0 %1048
          %v1050 = vrot.slane %v1049, 1
          %v1051 = vsel %vm514, %v1049, %v1050
          %v1053 = vadd.f32 %v1044, %v1051
          %s1054 = scalar_lea.vmem [#allocation2], 3
          %v1055 = vld [vmem:[%s1054] ss:$2 sm:$0x3]
          %v1056 = vstv %s428
          %v1057 = vmul.f32 %v1056, %v1055
          %1059 = vrot.lane.b32.xlu0 %v1057, 80
          %v1060 = vpop.permute.xlu0 %1059
          %v1061 = vrot.slane %v1060, 7
          %v1062 = vsel %vm524, %v1061, %v1060
          %v1064 = vadd.f32 %v1053, %v1062
          %v1065 = vstv %s435
          %v1066 = vmul.f32 %v1065, %v594
          %1068 = vrot.lane.b32.xlu0 %v1066, 64
          %v1069 = vpop.permute.xlu0 %1068
          %v1070 = vrot.slane %v1069, 7
          %v1071 = vsel %vm536, %v1070, %v1069
          %v1073 = vadd.f32 %v1064, %v1071
          %v1074 = vstv %s442
          %v1075 = vmul.f32 %v1074, %v594
          %1077 = vrot.lane.b32.xlu0 %v1075, 48
          %v1078 = vpop.permute.xlu0 %1077
          %v1079 = vrot.slane %v1078, 7
          %v1080 = vsel %vm546, %v1079, %v1078
          %v1082 = vadd.f32 %v1073, %v1080
          %v1083 = vstv %s449
          %v1084 = vmul.f32 %v1083, %v594
          %1086 = vrot.lane.b32.xlu0 %v1084, 32
          %v1087 = vpop.permute.xlu0 %1086
          %v1088 = vrot.slane %v1087, 7
          %v1089 = vsel %vm556, %v1088, %v1087
          %v1091 = vadd.f32 %v1082, %v1089
          %v1092 = vadd.f32 %v1032, %v1091
          %v1094 = vlaneseq
          %v1095 = vshrl.u32 %v1094, 7
          %v1096 = vsub.s32 0, %v1095
          %v1097 = vrot.slane %v1092, %v1096
          %v1098 = vlaneseq
          %v1099 = vshrl.u32 %v1098, 7
          %v1100 = vsub.s32 1, %v1099
          %v1101 = vrot.slane %v1092, %v1100
          %v1102 = vlaneseq
          %v1103 = vshrl.u32 %v1102, 7
          %v1104 = vsub.s32 2, %v1103
          %v1105 = vrot.slane %v1092, %v1104
          %1106 = vrot.lane.b32.xlu0 %v1097, 48
          %v1107 = vpop.permute.xlu0 %1106
          %1108 = vrot.lane.b32.xlu0 %v1101, 48
          %v1109 = vpop.permute.xlu0 %1108
          %1110 = vrot.lane.b32.xlu0 %v1105, 48
          %v1111 = vpop.permute.xlu0 %1110
          %v1112 = vsel %vm546, %v1107, %v1109
          %v1113 = vsel %vm546, %v1109, %v1111
          %v1116 = vmul.f32 %v971, %v1112
          %v1117 = vmul.f32 %v972, %v1113
          %v1118 = vadd.f32 %v961, %v1116
          %v1119 = vadd.f32 %v962, %v1117
          %v1120 = vadd.s32 %v479, 1
          %v1121 = vadd.s32 %v480, 1
          %vm1122 = vcmp.ge.s32.totalorder %v1120, 0
          %vm1123 = vcmp.ge.s32.totalorder %v1121, 0
          %vm1124 = vcmp.lt.s32.totalorder %v1120, 16
          %vm1125 = vcmp.lt.s32.totalorder %v1121, 16
          %vm1126 = vmand %vm1122, %vm1124
          %vm1127 = vmand %vm1123, %vm1125
          %v1128 = vsel %vm1126, 1, 0
          %v1129 = vsel %vm1127, 1, 0
          %v1130 = vcvt.s32.f32 %v1128
          %v1131 = vcvt.s32.f32 %v1129
          %v1132 = vstv %s359
          %v1133 = vmul.f32 %v1132, %v494
          %v1134 = vadd.f32 %v1133, 0.0
          %v1135 = vstv %s366
          %v1136 = vmul.f32 %v1135, %v494
          %1138 = vrot.lane.b32.xlu0 %v1136, 112
          %v1139 = vpop.permute.xlu0 %1138
          %v1140 = vrot.slane %v1139, 1
          %v1141 = vsel %vm504, %v1139, %v1140
          %v1143 = vadd.f32 %v1134, %v1141
          %v1144 = vstv %s373
          %v1145 = vmul.f32 %v1144, %v494
          %1147 = vrot.lane.b32.xlu0 %v1145, 96
          %v1148 = vpop.permute.xlu0 %1147
          %v1149 = vrot.slane %v1148, 1
          %v1150 = vsel %vm514, %v1148, %v1149
          %v1152 = vadd.f32 %v1143, %v1150
          %v1153 = vstv %s380
          %v1154 = vmul.f32 %v1153, %v529
          %1156 = vrot.lane.b32.xlu0 %v1154, 80
          %v1157 = vpop.permute.xlu0 %1156
          %v1158 = vrot.slane %v1157, 7
          %v1159 = vsel %vm524, %v1158, %v1157
          %v1161 = vadd.f32 %v1152, %v1159
          %v1162 = vstv %s387
          %v1163 = vmul.f32 %v1162, %v529
          %1165 = vrot.lane.b32.xlu0 %v1163, 64
          %v1166 = vpop.permute.xlu0 %1165
          %v1167 = vrot.slane %v1166, 7
          %v1168 = vsel %vm536, %v1167, %v1166
          %v1170 = vadd.f32 %v1161, %v1168
          %v1171 = vstv %s394
          %v1172 = vmul.f32 %v1171, %v529
          %1174 = vrot.lane.b32.xlu0 %v1172, 48
          %v1175 = vpop.permute.xlu0 %1174
          %v1176 = vrot.slane %v1175, 7
          %v1177 = vsel %vm546, %v1176, %v1175
          %v1179 = vadd.f32 %v1170, %v1177
          %v1180 = vstv %s401
          %v1181 = vmul.f32 %v1180, %v529
          %1183 = vrot.lane.b32.xlu0 %v1181, 32
          %v1184 = vpop.permute.xlu0 %1183
          %v1185 = vrot.slane %v1184, 7
          %v1186 = vsel %vm556, %v1185, %v1184
          %v1188 = vadd.f32 %v1179, %v1186
          %v1189 = vadd.f32 %v1188, 0.0
          %v1190 = vstv %s408
          %v1191 = vmul.f32 %v1190, %v562
          %v1192 = vadd.f32 %v1191, 0.0
          %v1193 = vstv %s415
          %v1194 = vmul.f32 %v1193, %v562
          %1196 = vrot.lane.b32.xlu0 %v1194, 112
          %v1197 = vpop.permute.xlu0 %1196
          %v1198 = vrot.slane %v1197, 1
          %v1199 = vsel %vm504, %v1197, %v1198
          %v1201 = vadd.f32 %v1192, %v1199
          %v1202 = vstv %s422
          %v1203 = vmul.f32 %v1202, %v562
          %1205 = vrot.lane.b32.xlu0 %v1203, 96
          %v1206 = vpop.permute.xlu0 %1205
          %v1207 = vrot.slane %v1206, 1
          %v1208 = vsel %vm514, %v1206, %v1207
          %v1210 = vadd.f32 %v1201, %v1208
          %v1211 = vstv %s429
          %v1212 = vmul.f32 %v1211, %v594
          %1214 = vrot.lane.b32.xlu0 %v1212, 80
          %v1215 = vpop.permute.xlu0 %1214
          %v1216 = vrot.slane %v1215, 7
          %v1217 = vsel %vm524, %v1216, %v1215
          %v1219 = vadd.f32 %v1210, %v1217
          %v1220 = vstv %s436
          %v1221 = vmul.f32 %v1220, %v594
          %1223 = vrot.lane.b32.xlu0 %v1221, 64
          %v1224 = vpop.permute.xlu0 %1223
          %v1225 = vrot.slane %v1224, 7
          %v1226 = vsel %vm536, %v1225, %v1224
          %v1228 = vadd.f32 %v1219, %v1226
          %v1229 = vstv %s443
          %v1230 = vmul.f32 %v1229, %v594
          %1232 = vrot.lane.b32.xlu0 %v1230, 48
          %v1233 = vpop.permute.xlu0 %1232
          %v1234 = vrot.slane %v1233, 7
          %v1235 = vsel %vm546, %v1234, %v1233
          %v1237 = vadd.f32 %v1228, %v1235
          %v1238 = vstv %s450
          %v1239 = vmul.f32 %v1238, %v594
          %1241 = vrot.lane.b32.xlu0 %v1239, 32
          %v1242 = vpop.permute.xlu0 %1241
          %v1243 = vrot.slane %v1242, 7
          %v1244 = vsel %vm556, %v1243, %v1242
          %v1246 = vadd.f32 %v1237, %v1244
          %v1247 = vadd.f32 %v1189, %v1246
          %v1249 = vlaneseq
          %v1250 = vshrl.u32 %v1249, 7
          %v1251 = vsub.s32 0, %v1250
          %v1252 = vrot.slane %v1247, %v1251
          %v1253 = vlaneseq
          %v1254 = vshrl.u32 %v1253, 7
          %v1255 = vsub.s32 1, %v1254
          %v1256 = vrot.slane %v1247, %v1255
          %v1257 = vlaneseq
          %v1258 = vshrl.u32 %v1257, 7
          %v1259 = vsub.s32 2, %v1258
          %v1260 = vrot.slane %v1247, %v1259
          %1261 = vrot.lane.b32.xlu0 %v1252, 47
          %v1262 = vpop.permute.xlu0 %1261
          %1263 = vrot.lane.b32.xlu0 %v1256, 47
          %v1264 = vpop.permute.xlu0 %1263
          %1265 = vrot.lane.b32.xlu0 %v1260, 47
          %v1266 = vpop.permute.xlu0 %1265
          %vm1267 = vcmask 384000
          %v1268 = vsel %vm1267, %v1262, %v1264
          %v1269 = vsel %vm1267, %v1264, %v1266
          %v1272 = vmul.f32 %v1130, %v1268
          %v1273 = vmul.f32 %v1131, %v1269
          %v1274 = vadd.f32 %v1118, %v1272
          %v1275 = vadd.f32 %v1119, %v1273
          %v1276 = vadd.s32 %v479, 2
          %v1277 = vadd.s32 %v480, 2
          %vm1278 = vcmp.ge.s32.totalorder %v1276, 0
          %vm1279 = vcmp.ge.s32.totalorder %v1277, 0
          %vm1280 = vcmp.lt.s32.totalorder %v1276, 16
          %vm1281 = vcmp.lt.s32.totalorder %v1277, 16
          %vm1282 = vmand %vm1278, %vm1280
          %vm1283 = vmand %vm1279, %vm1281
          %v1284 = vsel %vm1282, 1, 0
          %v1285 = vsel %vm1283, 1, 0
          %v1286 = vcvt.s32.f32 %v1284
          %v1287 = vcvt.s32.f32 %v1285
          %v1288 = vstv %s360
          %v1289 = vmul.f32 %v1288, %v494
          %v1290 = vadd.f32 %v1289, 0.0
          %v1291 = vstv %s367
          %v1292 = vmul.f32 %v1291, %v494
          %1294 = vrot.lane.b32.xlu0 %v1292, 112
          %v1295 = vpop.permute.xlu0 %1294
          %v1296 = vrot.slane %v1295, 1
          %v1297 = vsel %vm504, %v1295, %v1296
          %v1299 = vadd.f32 %v1290, %v1297
          %v1300 = vstv %s374
          %v1301 = vmul.f32 %v1300, %v494
          %1303 = vrot.lane.b32.xlu0 %v1301, 96
          %v1304 = vpop.permute.xlu0 %1303
          %v1305 = vrot.slane %v1304, 1
          %v1306 = vsel %vm514, %v1304, %v1305
          %v1308 = vadd.f32 %v1299, %v1306
          %v1309 = vstv %s381
          %v1310 = vmul.f32 %v1309, %v529
          %1312 = vrot.lane.b32.xlu0 %v1310, 80
          %v1313 = vpop.permute.xlu0 %1312
          %v1314 = vrot.slane %v1313, 7
          %v1315 = vsel %vm524, %v1314, %v1313
          %v1317 = vadd.f32 %v1308, %v1315
          %v1318 = vstv %s388
          %v1319 = vmul.f32 %v1318, %v529
          %1321 = vrot.lane.b32.xlu0 %v1319, 64
          %v1322 = vpop.permute.xlu0 %1321
          %v1323 = vrot.slane %v1322, 7
          %v1324 = vsel %vm536, %v1323, %v1322
          %v1326 = vadd.f32 %v1317, %v1324
          %v1327 = vstv %s395
          %v1328 = vmul.f32 %v1327, %v529
          %1330 = vrot.lane.b32.xlu0 %v1328, 48
          %v1331 = vpop.permute.xlu0 %1330
          %v1332 = vrot.slane %v1331, 7
          %v1333 = vsel %vm546, %v1332, %v1331
          %v1335 = vadd.f32 %v1326, %v1333
          %v1336 = vstv %s402
          %v1337 = vmul.f32 %v1336, %v529
          %1339 = vrot.lane.b32.xlu0 %v1337, 32
          %v1340 = vpop.permute.xlu0 %1339
          %v1341 = vrot.slane %v1340, 7
          %v1342 = vsel %vm556, %v1341, %v1340
          %v1344 = vadd.f32 %v1335, %v1342
          %v1345 = vadd.f32 %v1344, 0.0
          %v1346 = vstv %s409
          %v1347 = vmul.f32 %v1346, %v562
          %v1348 = vadd.f32 %v1347, 0.0
          %v1349 = vstv %s416
          %v1350 = vmul.f32 %v1349, %v562
          %1352 = vrot.lane.b32.xlu0 %v1350, 112
          %v1353 = vpop.permute.xlu0 %1352
          %v1354 = vrot.slane %v1353, 1
          %v1355 = vsel %vm504, %v1353, %v1354
          %v1357 = vadd.f32 %v1348, %v1355
          %v1358 = vstv %s423
          %v1359 = vmul.f32 %v1358, %v562
          %1361 = vrot.lane.b32.xlu0 %v1359, 96
          %v1362 = vpop.permute.xlu0 %1361
          %v1363 = vrot.slane %v1362, 1
          %v1364 = vsel %vm514, %v1362, %v1363
          %v1366 = vadd.f32 %v1357, %v1364
          %v1367 = vstv %s430
          %v1368 = vmul.f32 %v1367, %v594
          %1370 = vrot.lane.b32.xlu0 %v1368, 80
          %v1371 = vpop.permute.xlu0 %1370
          %v1372 = vrot.slane %v1371, 7
          %v1373 = vsel %vm524, %v1372, %v1371
          %v1375 = vadd.f32 %v1366, %v1373
          %v1376 = vstv %s437
          %v1377 = vmul.f32 %v1376, %v594
          %1379 = vrot.lane.b32.xlu0 %v1377, 64
          %v1380 = vpop.permute.xlu0 %1379
          %v1381 = vrot.slane %v1380, 7
          %v1382 = vsel %vm536, %v1381, %v1380
          %v1384 = vadd.f32 %v1375, %v1382
          %v1385 = vstv %s444
          %v1386 = vmul.f32 %v1385, %v594
          %1388 = vrot.lane.b32.xlu0 %v1386, 48
          %v1389 = vpop.permute.xlu0 %1388
          %v1390 = vrot.slane %v1389, 7
          %v1391 = vsel %vm546, %v1390, %v1389
          %v1393 = vadd.f32 %v1384, %v1391
          %v1394 = vstv %s451
          %v1395 = vmul.f32 %v1394, %v594
          %1397 = vrot.lane.b32.xlu0 %v1395, 32
          %v1398 = vpop.permute.xlu0 %1397
          %v1399 = vrot.slane %v1398, 7
          %v1400 = vsel %vm556, %v1399, %v1398
          %v1402 = vadd.f32 %v1393, %v1400
          %v1403 = vadd.f32 %v1345, %v1402
          %v1405 = vlaneseq
          %v1406 = vshrl.u32 %v1405, 7
          %v1407 = vsub.s32 0, %v1406
          %v1408 = vrot.slane %v1403, %v1407
          %v1409 = vlaneseq
          %v1410 = vshrl.u32 %v1409, 7
          %v1411 = vsub.s32 1, %v1410
          %v1412 = vrot.slane %v1403, %v1411
          %v1413 = vlaneseq
          %v1414 = vshrl.u32 %v1413, 7
          %v1415 = vsub.s32 2, %v1414
          %v1416 = vrot.slane %v1403, %v1415
          %1417 = vrot.lane.b32.xlu0 %v1408, 46
          %v1418 = vpop.permute.xlu0 %1417
          %1419 = vrot.lane.b32.xlu0 %v1412, 46
          %v1420 = vpop.permute.xlu0 %1419
          %1421 = vrot.lane.b32.xlu0 %v1416, 46
          %v1422 = vpop.permute.xlu0 %1421
          %vm1423 = vcmask 375808
          %v1424 = vsel %vm1423, %v1418, %v1420
          %v1425 = vsel %vm1423, %v1420, %v1422
          %v1428 = vmul.f32 %v1286, %v1424
          %v1429 = vmul.f32 %v1287, %v1425
          %v1430 = vadd.f32 %v1274, %v1428
          %v1431 = vadd.f32 %v1275, %v1429
          %v1432 = vadd.s32 %v479, 3
          %v1433 = vadd.s32 %v480, 3
          %vm1434 = vcmp.ge.s32.totalorder %v1432, 0
          %vm1435 = vcmp.ge.s32.totalorder %v1433, 0
          %vm1436 = vcmp.lt.s32.totalorder %v1432, 16
          %vm1437 = vcmp.lt.s32.totalorder %v1433, 16
          %vm1438 = vmand %vm1434, %vm1436
          %vm1439 = vmand %vm1435, %vm1437
          %v1440 = vsel %vm1438, 1, 0
          %v1441 = vsel %vm1439, 1, 0
          %v1442 = vcvt.s32.f32 %v1440
          %v1443 = vcvt.s32.f32 %v1441
          %v1444 = vstv %s361
          %v1445 = vmul.f32 %v1444, %v494
          %v1446 = vadd.f32 %v1445, 0.0
          %v1447 = vstv %s368
          %v1448 = vmul.f32 %v1447, %v494
          %1450 = vrot.lane.b32.xlu0 %v1448, 112
          %v1451 = vpop.permute.xlu0 %1450
          %v1452 = vrot.slane %v1451, 1
          %v1453 = vsel %vm504, %v1451, %v1452
          %v1455 = vadd.f32 %v1446, %v1453
          %v1456 = vstv %s375
          %v1457 = vmul.f32 %v1456, %v494
          %1459 = vrot.lane.b32.xlu0 %v1457, 96
          %v1460 = vpop.permute.xlu0 %1459
          %v1461 = vrot.slane %v1460, 1
          %v1462 = vsel %vm514, %v1460, %v1461
          %v1464 = vadd.f32 %v1455, %v1462
          %v1465 = vstv %s382
          %v1466 = vmul.f32 %v1465, %v529
          %1468 = vrot.lane.b32.xlu0 %v1466, 80
          %v1469 = vpop.permute.xlu0 %1468
          %v1470 = vrot.slane %v1469, 7
          %v1471 = vsel %vm524, %v1470, %v1469
          %v1473 = vadd.f32 %v1464, %v1471
          %v1474 = vstv %s389
          %v1475 = vmul.f32 %v1474, %v529
          %1477 = vrot.lane.b32.xlu0 %v1475, 64
          %v1478 = vpop.permute.xlu0 %1477
          %v1479 = vrot.slane %v1478, 7
          %v1480 = vsel %vm536, %v1479, %v1478
          %v1482 = vadd.f32 %v1473, %v1480
          %v1483 = vstv %s396
          %v1484 = vmul.f32 %v1483, %v529
          %1486 = vrot.lane.b32.xlu0 %v1484, 48
          %v1487 = vpop.permute.xlu0 %1486
          %v1488 = vrot.slane %v1487, 7
          %v1489 = vsel %vm546, %v1488, %v1487
          %v1491 = vadd.f32 %v1482, %v1489
          %v1492 = vstv %s403
          %v1493 = vmul.f32 %v1492, %v529
          %1495 = vrot.lane.b32.xlu0 %v1493, 32
          %v1496 = vpop.permute.xlu0 %1495
          %v1497 = vrot.slane %v1496, 7
          %v1498 = vsel %vm556, %v1497, %v1496
          %v1500 = vadd.f32 %v1491, %v1498
          %v1501 = vadd.f32 %v1500, 0.0
          %v1502 = vstv %s410
          %v1503 = vmul.f32 %v1502, %v562
          %v1504 = vadd.f32 %v1503, 0.0
          %v1505 = vstv %s417
          %v1506 = vmul.f32 %v1505, %v562
          %1508 = vrot.lane.b32.xlu0 %v1506, 112
          %v1509 = vpop.permute.xlu0 %1508
          %v1510 = vrot.slane %v1509, 1
          %v1511 = vsel %vm504, %v1509, %v1510
          %v1513 = vadd.f32 %v1504, %v1511
          %v1514 = vstv %s424
          %v1515 = vmul.f32 %v1514, %v562
          %1517 = vrot.lane.b32.xlu0 %v1515, 96
          %v1518 = vpop.permute.xlu0 %1517
          %v1519 = vrot.slane %v1518, 1
          %v1520 = vsel %vm514, %v1518, %v1519
          %v1522 = vadd.f32 %v1513, %v1520
          %v1523 = vstv %s431
          %v1524 = vmul.f32 %v1523, %v594
          %1526 = vrot.lane.b32.xlu0 %v1524, 80
          %v1527 = vpop.permute.xlu0 %1526
          %v1528 = vrot.slane %v1527, 7
          %v1529 = vsel %vm524, %v1528, %v1527
          %v1531 = vadd.f32 %v1522, %v1529
          %v1532 = vstv %s438
          %v1533 = vmul.f32 %v1532, %v594
          %1535 = vrot.lane.b32.xlu0 %v1533, 64
          %v1536 = vpop.permute.xlu0 %1535
          %v1537 = vrot.slane %v1536, 7
          %v1538 = vsel %vm536, %v1537, %v1536
          %v1540 = vadd.f32 %v1531, %v1538
          %v1541 = vstv %s445
          %v1542 = vmul.f32 %v1541, %v594
          %1544 = vrot.lane.b32.xlu0 %v1542, 48
          %v1545 = vpop.permute.xlu0 %1544
          %v1546 = vrot.slane %v1545, 7
          %v1547 = vsel %vm546, %v1546, %v1545
          %v1549 = vadd.f32 %v1540, %v1547
          %v1550 = vstv %s452
          %v1551 = vmul.f32 %v1550, %v594
          %1553 = vrot.lane.b32.xlu0 %v1551, 32
          %v1554 = vpop.permute.xlu0 %1553
          %v1555 = vrot.slane %v1554, 7
          %v1556 = vsel %vm556, %v1555, %v1554
          %v1558 = vadd.f32 %v1549, %v1556
          %v1559 = vadd.f32 %v1501, %v1558
          %v1561 = vlaneseq
          %v1562 = vshrl.u32 %v1561, 7
          %v1563 = vsub.s32 0, %v1562
          %v1564 = vrot.slane %v1559, %v1563
          %v1565 = vlaneseq
          %v1566 = vshrl.u32 %v1565, 7
          %v1567 = vsub.s32 1, %v1566
          %v1568 = vrot.slane %v1559, %v1567
          %v1569 = vlaneseq
          %v1570 = vshrl.u32 %v1569, 7
          %v1571 = vsub.s32 2, %v1570
          %v1572 = vrot.slane %v1559, %v1571
          %1573 = vrot.lane.b32.xlu0 %v1564, 45
          %v1574 = vpop.permute.xlu0 %1573
          %1575 = vrot.lane.b32.xlu0 %v1568, 45
          %v1576 = vpop.permute.xlu0 %1575
          %1577 = vrot.lane.b32.xlu0 %v1572, 45
          %v1578 = vpop.permute.xlu0 %1577
          %vm1579 = vcmask 367616
          %v1580 = vsel %vm1579, %v1574, %v1576
          %v1581 = vsel %vm1579, %v1576, %v1578
          %v1584 = vmul.f32 %v1442, %v1580
          %v1585 = vmul.f32 %v1443, %v1581
          %v1586 = vadd.f32 %v1430, %v1584
          %v1587 = vadd.f32 %v1431, %v1585
          %v1588 = vxor.u32 %v1586, 2147483648
          %v1589 = vxor.u32 %v1587, 2147483648
          %v1590 = vmul.f32 %v1588, 1.442695
          %v1591 = vpow.pop %v1590
          %v1592 = vmul.f32 %v1589, 1.442695
          %v1593 = vpow.pop %v1592
          %v1594 = vadd.f32 %v1591, 1.0
          %v1595 = vadd.f32 %v1593, 1.0
          %v1596 = vrcp.pop %v1594
          %v1597 = vmul.f32 1.0, %v1596
          %v1598 = vrcp.pop %v1595
          %v1599 = vmul.f32 1.0, %v1598
          %v1602 = vcombine.low %v1597, %v1599
          %v1604 = vunpack.c.l.s4 1966171168
          %v1605 = vunpack.c.0.s8 %v1604
          %v1606 = vlaneseq
          %v1607 = vshrl.u32 %v1606, 7
          %v1608 = vsub.s32 %v1605, %v1607
          %v1609 = vrot.slane %v1602, %v1608
          %v1611 = vunpack.c.l.s4 1966171168
          %v1612 = vunpack.c.0.s8 %v1611
          %v1613 = vlaneseq
          %v1614 = vshrl.u32 %v1613, 7
          %v1615 = vsub.s32 %v1612, %v1614
          %v1616 = vrot.slane %v1609, %v1615
          %v1618 = vlaneseq
          %vm1619 = vcmp.ge.s32.totalorder %v1618, 0
          %vm1620 = vcmp.lt.s32.totalorder %v1618, 256
          %vm1621 = vmand %vm1619, %vm1620
          %1622 = vst.msk [vmem:[%s217] sm:$0x3] %vm1621, %v1616
        $region52: #{tpu_custom_call.1} parent=31 // pred_fallthru
          _
        %s1623 = sand.u32 %s112, 1
        %s1624 = scalar_lea.sflag [#allocation6], %s1623
        %s1625 = sand.u32 %s112, 1
        %s1626 = smul.addr %s1625, 2
        %s1627 = scalar_lea.vmem [#allocation9], %s1626
        // Predicated region
        $region53: #{tpu_custom_call.1} parent=31 // pred_check
          %p1628 = pneg %p122
        $region54: #{tpu_custom_call.1} parent=31 // pred_check_branch
          %1630 = sbr.rel (%p1628) target = $region56
        $region55: #{tpu_custom_call.1} parent=31 // pred_region
          %s1632 = ssub.s32 32, 32
          %1633 = vsyncadd %s1624, %s1632
          %s1634 = smul.addr %s26, 2
          %s1635 = smul.addr %s1634, 16
          %s1636 = scalar_lea.hbm %s3, %s1635
          %s1638 = sshll.u32 %s1627, 4
          %s1639 = int_to_ptr.vmem [resolvable:$true] %s1638
          %1641 = dma.vmem_to_hbm [thread:$0]  %s1639, 32, %s1636, %s1624
        $region56: #{tpu_custom_call.1} parent=31 // pred_fallthru
          _
      $region32: #{tpu_custom_call.1} parent=5 // pred_fallthru
        _
      %p1642 = scmp.le.s32.totalorder 2, %s17
      // Predicated region
      $region57: #{tpu_custom_call.1} parent=5 // pred_check
        %p1643 = pneg %p1642
      $region58: #{tpu_custom_call.1} parent=5 // pred_check_branch
        %1645 = sbr.rel (%p1643) target = $region60
      $region59: #{tpu_custom_call.1} parent=5 // pred_region
        %s1646 = ssub.s32 %s17, 2
        // Predicated region
        $region61: #{tpu_custom_call.1} parent=59 // pred_check
          %p1647 = pneg %p128
        $region62: #{tpu_custom_call.1} parent=59 // pred_check_branch
          %1649 = sbr.rel (%p1647) target = $region64
        $region63: #{tpu_custom_call.1} parent=59 // pred_region
          %s1650 = sand.u32 %s113, 1
          %s1651 = scalar_lea.sflag [#allocation6], %s1650
          %s1652 = sand.u32 %s113, 1
          %s1653 = smul.addr %s1652, 2
          %s1654 = scalar_lea.vmem [#allocation9], %s1653
          %1655 = dma.done %s1651, 32
        $region64: #{tpu_custom_call.1} parent=59 // pred_fallthru
          _
      $region60: #{tpu_custom_call.1} parent=5 // pred_fallthru
        _
    $region6: #{tpu_custom_call.1} parent=1 // loop_footer
      %s21 = sadd.s32 1, %s17
    $region7: #{tpu_custom_call.1} parent=1 // loop_footer_branch
      %16 = sbr.rel target = $region3
    $region8: #{tpu_custom_call.1} parent=1 // loop_exit
      _
    %1656 = vsyncpa [#allocation5], 1
    %s1657 = scalar_lea.sflag [#allocation5], 1
    %1658 = vsyncpa %s1657, 1
    %1659 = vsyncpa [#allocation6], 1
    %s1660 = scalar_lea.sflag [#allocation6], 1
    %1661 = vsyncpa %s1660, 1
    %1662 = vsyncpa [#allocation7], 1
    %s1663 = scalar_lea.sflag [#allocation7], 1
    %1664 = vsyncpa %s1663, 1

</llo_original>
